<compile_context>
chip_gen: v7x
topology: tpu7x:2x2x1
jax: 0.10.0
libtpu: 0.0.40
codegen_flags: <defaults>
</compile_context>

<pallas_src>
import functools

import jax
import jax.numpy as jnp
from jax.experimental import pallas as pl
from jax.experimental.pallas import tpu as pltpu


def _mlp_kernel(num_hidden, matmul_dtype, x_ref, *refs):
    """Fused MLP forward for one (tm, D_in) row tile.

    refs = (w1, b1, [wh_i, bh_i] * num_hidden, w_last, b_last, out_ref)
    Weights + activations in bf16 (matmul_dtype), biases f32, f32 accumulation.
    """
    out_ref = refs[-1]
    param_refs = refs[:-1]

    def linear(h, w_ref, b_ref):
        # MXU matmul with f32 accumulation; bias add in f32.
        return jnp.dot(h, w_ref[...], preferred_element_type=jnp.float32) + b_ref[...]

    h = x_ref[...]  # already matmul_dtype (cast once in the wrapper)

    # First layer + hidden layers, each followed by ReLU.  Epilogue (bias+ReLU)
    # stays f32 (safe on v5e, no bf16 VPU needed), then one cast back to bf16
    # so the next MXU input needs no cast and live footprint is halved.
    for l in range(num_hidden + 1):
        w_ref = param_refs[2 * l]
        b_ref = param_refs[2 * l + 1]
        h = jnp.maximum(linear(h, w_ref, b_ref), 0.0).astype(matmul_dtype)

    # Last layer: no activation (matches the PyTorch forward).
    out_ref[...] = linear(h, param_refs[-2], param_refs[-1]).astype(out_ref.dtype)


def _round_up(v, m):
    return ((v + m - 1) // m) * m


def _choose_tile_and_vmem(M, D_in, D_out, params, block_m):
    """Pick a row tile (multiple of 16) and a vmem_limit from the HW budget."""
    try:
        cap = int(pltpu.get_tpu_info().vmem_capacity_bytes)  # per-core VMEM
    except Exception:
        cap = 64 * 1024 * 1024  # conservative fallback = v7x per-TensorCore VMEM
    budget = int(cap * 0.75)  # headroom for compiler scratch / pipelining

    # Resident (constant-index, single-buffered) params: bf16 W + f32 b.
    param_bytes = sum(w.shape[0] * w.shape[1] * 2 + w.shape[1] * 4 for (w, _) in params)
    max_width = max([D_in] + [w.shape[1] for (w, _) in params])

    def footprint(tm):
        return (param_bytes                 # resident weights / biases
                + 2 * tm * D_in * 2         # double-buffered bf16 input tile
                + 2 * tm * D_out * 4        # double-buffered f32 output tile
                + 3 * tm * max_width * 4)   # live activations + scratch slack

    # Tiny-D case: prefer one (or few) big grid steps -> tm up to round_up(M,16).
    tm = max(16, min(_round_up(block_m, 16), _round_up(M, 16)))
    while tm > 16 and footprint(tm) > budget:
        tm = max(16, _round_up(tm // 2, 16))

    # ~96 MiB on v5e/v6e (128 MiB VMEM), ~48 MiB on v7x (64 MiB/TC).
    vmem_limit = max(32 * 1024 * 1024, min(budget, 100 * 1024 * 1024))
    return tm, vmem_limit


def mlp_forward(x, params, *, block_m=1024, matmul_dtype=jnp.bfloat16):
    """Run the fused MLP kernel.

    x      : (M, D_in) float32
    params : list of (w: (d_in, d_out) f32, b: (d_out,) f32) for
             [first, hidden_0..hidden_{n-1}, last].
    """
    M, D_in = x.shape
    num_hidden = len(params) - 2
    D_out = params[-1][0].shape[1]

    tm, vmem_limit = _choose_tile_and_vmem(M, D_in, D_out, params, block_m)
    grid_m = pl.cdiv(M, tm)  # ragged last block handled by Pallas masking

    # bf16 input: halves input DMA + VMEM double-buffer, no per-tile cast.
    flat_inputs = [x.astype(matmul_dtype)]
    for (w, b) in params:
        flat_inputs.append(w.astype(matmul_dtype))
        flat_inputs.append(b.astype(jnp.float32).reshape(1, -1))

    def build_specs(single_buffer_params):
        in_specs = [pl.BlockSpec((tm, D_in), lambda i: (i, 0))]
        pm = {}
        if single_buffer_params and hasattr(pl, "Buffered"):
            # Resident params never change block index -> single-buffer them.
            pm = dict(pipeline_mode=pl.Buffered(1))
        for (w, _) in params:
            k, n = w.shape
            in_specs.append(pl.BlockSpec((k, n), lambda i: (0, 0), **pm))
            in_specs.append(pl.BlockSpec((1, n), lambda i: (0, 0), **pm))
        return in_specs

    kernel = functools.partial(_mlp_kernel, num_hidden, matmul_dtype)

    def call(single_buffer_params):
        return pl.pallas_call(
            kernel,
            out_shape=jax.ShapeDtypeStruct((M, D_out), jnp.float32),
            grid=(grid_m,),
            in_specs=build_specs(single_buffer_params),
            # TODO(synk): for D_out < 128 a lane-dense packed output layout
            # (folding row tiles into lanes) would further cut masked stores;
            # here we only maximize tm.
            out_specs=pl.BlockSpec((tm, D_out), lambda i: (i, 0)),
            compiler_params=pltpu.CompilerParams(
                dimension_semantics=("parallel",),  # megacore row-tile sharding
                vmem_limit_bytes=vmem_limit,
            ),
        )(*flat_inputs)

    try:
        return call(True)
    except Exception:
        # Fallback if this JAX version rejects Buffered(1) for resident inputs.
        return call(False)


class MultiLayerPerceptronPallas:
    """Pallas re-implementation of the PyTorch MultiLayerPerceptron forward."""

    def __init__(self, mpl_size, num_layers, key):
        input_size, hidden_size, output_size = mpl_size
        assert num_layers >= 2
        self.num_layers = num_layers

        dims = [input_size] + [hidden_size] * (num_layers - 1) + [output_size]
        self.params = []
        for i in range(num_layers):
            fan_in, fan_out = dims[i], dims[i + 1]
            key, wk, bk = jax.random.split(key, 3)
            # PyTorch nn.Linear default init -> U(-1/sqrt(fan_in), 1/sqrt(fan_in)).
            bound = 1.0 / float(fan_in) ** 0.5
            w = jax.random.uniform(wk, (fan_in, fan_out),
                                   minval=-bound, maxval=bound, dtype=jnp.float32)
            b = jax.random.uniform(bk, (fan_out,),
                                   minval=-bound, maxval=bound, dtype=jnp.float32)
            self.params.append((w, b))

        # TODO(synk): the PyTorch module also builds nn.BatchNorm1d layers
        # (self.norm / self.norm_hidden) that are never called in forward();
        # they (and their running stats) are intentionally not replicated.
        # TODO(synk): for very large hidden sizes on v7x, stream oversized
        # weights from HBM (memory_space=pl.ANY / extra grid axis) instead of
        # keeping everything resident; unnecessary at these MLP sizes.

    def __call__(self, x, *, block_m=1024):
        return mlp_forward(x, self.params, block_m=block_m)


def _mlp_reference(x, params):
    """Pure-JAX f32 reference of the same forward pass."""
    h = x
    for i, (w, b) in enumerate(params):
        h = h @ w + b
        if i < len(params) - 1:
            h = jnp.maximum(h, 0.0)
    return h


if __name__ == "__main__":
    key = jax.random.PRNGKey(0)
    key, xkey, pkey = jax.random.split(key, 3)

    # Small shapes consistent with the module: mpl_size=(16, 32, 8), 4 layers
    # (first + 2 hidden + last).  batch=100 is NOT a multiple of the tile so
    # the ragged-last-block path is exercised too.
    batch, input_size, hidden_size, output_size = 100, 16, 32, 8
    num_layers = 4

    x = jax.random.normal(xkey, (batch, input_size), dtype=jnp.float32)
    model = MultiLayerPerceptronPallas(
        (input_size, hidden_size, output_size), num_layers, pkey)

    y_ref = _mlp_reference(x, model.params)
    ref_scale = float(jnp.max(jnp.abs(y_ref)))

    # 1) default tiling: whole batch in one big row tile (tiny-D heuristic).
    y1 = jax.block_until_ready(model(x))
    # 2) multi-tile ragged grid: block_m=64 -> grid of 2, last block partial.
    y2 = jax.block_until_ready(model(x, block_m=64))

    for y in (y1, y2):
        assert y.shape == (batch, output_size), y.shape
        assert bool(jnp.all(jnp.isfinite(y)))
        max_err = float(jnp.max(jnp.abs(y - y_ref)))
        # bf16 weights + bf16 activation chain -> relative, depth-aware tolerance.
        assert max_err < 1e-2 + 5e-2 * max(1.0, ref_scale), f"max abs err {max_err}"

    print("KERNEL_OK")
</pallas_src>

<mosaic_0001>
module attributes {stable_mosaic.version = 11 : i64} {
  func.func @_mlp_kernel(%arg0: i32, %arg1: memref<112x16xbf16, #tpu.memory_space<vmem>>, %arg2: memref<16x32xbf16, #tpu.memory_space<vmem>>, %arg3: memref<1x32xf32, #tpu.memory_space<vmem>>, %arg4: memref<32x32xbf16, #tpu.memory_space<vmem>>, %arg5: memref<1x32xf32, #tpu.memory_space<vmem>>, %arg6: memref<32x32xbf16, #tpu.memory_space<vmem>>, %arg7: memref<1x32xf32, #tpu.memory_space<vmem>>, %arg8: memref<32x8xbf16, #tpu.memory_space<vmem>>, %arg9: memref<1x8xf32, #tpu.memory_space<vmem>>, %arg10: memref<112x8xf32, #tpu.memory_space<vmem>>) attributes {dimension_semantics = [#tpu.dimension_semantics<parallel>], iteration_bounds = array<i64: 1>, scalar_prefetch = 0 : i64, scratch_operands = 0 : i64, tpu.core_type = #tpu.core_type<tc>, window_params = [{transform_indices = @transform_0, window_bounds = array<i64: 112, 16>}, {pipeline_mode = #tpu.pipeline_mode<synchronous>, transform_indices = @transform_1, window_bounds = array<i64: 16, 32>}, {pipeline_mode = #tpu.pipeline_mode<synchronous>, transform_indices = @transform_2, window_bounds = array<i64: 1, 32>}, {pipeline_mode = #tpu.pipeline_mode<synchronous>, transform_indices = @transform_3, window_bounds = array<i64: 32, 32>}, {pipeline_mode = #tpu.pipeline_mode<synchronous>, transform_indices = @transform_4, window_bounds = array<i64: 1, 32>}, {pipeline_mode = #tpu.pipeline_mode<synchronous>, transform_indices = @transform_5, window_bounds = array<i64: 32, 32>}, {pipeline_mode = #tpu.pipeline_mode<synchronous>, transform_indices = @transform_6, window_bounds = array<i64: 1, 32>}, {pipeline_mode = #tpu.pipeline_mode<synchronous>, transform_indices = @transform_7, window_bounds = array<i64: 32, 8>}, {pipeline_mode = #tpu.pipeline_mode<synchronous>, transform_indices = @transform_8, window_bounds = array<i64: 1, 8>}, {transform_indices = @transform_9, window_bounds = array<i64: 112, 8>}]} {
    %c0 = arith.constant 0 : index
    %c0_0 = arith.constant 0 : index
    %0 = vector.load %arg1[%c0, %c0_0] : memref<112x16xbf16, #tpu.memory_space<vmem>>, vector<112x16xbf16>
    %c0_1 = arith.constant 0 : index
    %c0_2 = arith.constant 0 : index
    %1 = vector.load %arg2[%c0_1, %c0_2] : memref<16x32xbf16, #tpu.memory_space<vmem>>, vector<16x32xbf16>
    %cst = arith.constant dense<0.000000e+00> : vector<112x32xf32>
    %2 = tpu.matmul %0, %1, %cst {dimension_numbers = #tpu.dot_dimension_numbers<[1], [0], [0], [1], [0, 0, 1, 1], [], []>} : vector<112x16xbf16>, vector<16x32xbf16>, vector<112x32xf32> -> vector<112x32xf32>
    %c0_3 = arith.constant 0 : index
    %c0_4 = arith.constant 0 : index
    %3 = vector.load %arg3[%c0_3, %c0_4] : memref<1x32xf32, #tpu.memory_space<vmem>>, vector<1x32xf32>
    %4 = vector.broadcast %3 : vector<1x32xf32> to vector<112x32xf32>
    %5 = arith.addf %2, %4 : vector<112x32xf32>
    %cst_5 = arith.constant 0.000000e+00 : f32
    %6 = vector.broadcast %cst_5 : f32 to vector<112x32xf32>
    %7 = arith.maximumf %5, %6 : vector<112x32xf32>
    %8 = arith.truncf %7 : vector<112x32xf32> to vector<112x32xbf16>
    %c0_6 = arith.constant 0 : index
    %c0_7 = arith.constant 0 : index
    %9 = vector.load %arg4[%c0_6, %c0_7] : memref<32x32xbf16, #tpu.memory_space<vmem>>, vector<32x32xbf16>
    %cst_8 = arith.constant dense<0.000000e+00> : vector<112x32xf32>
    %10 = tpu.matmul %8, %9, %cst_8 {dimension_numbers = #tpu.dot_dimension_numbers<[1], [0], [0], [1], [0, 0, 1, 1], [], []>} : vector<112x32xbf16>, vector<32x32xbf16>, vector<112x32xf32> -> vector<112x32xf32>
    %c0_9 = arith.constant 0 : index
    %c0_10 = arith.constant 0 : index
    %11 = vector.load %arg5[%c0_9, %c0_10] : memref<1x32xf32, #tpu.memory_space<vmem>>, vector<1x32xf32>
    %12 = vector.broadcast %11 : vector<1x32xf32> to vector<112x32xf32>
    %13 = arith.addf %10, %12 : vector<112x32xf32>
    %cst_11 = arith.constant 0.000000e+00 : f32
    %14 = vector.broadcast %cst_11 : f32 to vector<112x32xf32>
    %15 = arith.maximumf %13, %14 : vector<112x32xf32>
    %16 = arith.truncf %15 : vector<112x32xf32> to vector<112x32xbf16>
    %c0_12 = arith.constant 0 : index
    %c0_13 = arith.constant 0 : index
    %17 = vector.load %arg6[%c0_12, %c0_13] : memref<32x32xbf16, #tpu.memory_space<vmem>>, vector<32x32xbf16>
    %cst_14 = arith.constant dense<0.000000e+00> : vector<112x32xf32>
    %18 = tpu.matmul %16, %17, %cst_14 {dimension_numbers = #tpu.dot_dimension_numbers<[1], [0], [0], [1], [0, 0, 1, 1], [], []>} : vector<112x32xbf16>, vector<32x32xbf16>, vector<112x32xf32> -> vector<112x32xf32>
    %c0_15 = arith.constant 0 : index
    %c0_16 = arith.constant 0 : index
    %19 = vector.load %arg7[%c0_15, %c0_16] : memref<1x32xf32, #tpu.memory_space<vmem>>, vector<1x32xf32>
    %20 = vector.broadcast %19 : vector<1x32xf32> to vector<112x32xf32>
    %21 = arith.addf %18, %20 : vector<112x32xf32>
    %cst_17 = arith.constant 0.000000e+00 : f32
    %22 = vector.broadcast %cst_17 : f32 to vector<112x32xf32>
    %23 = arith.maximumf %21, %22 : vector<112x32xf32>
    %24 = arith.truncf %23 : vector<112x32xf32> to vector<112x32xbf16>
    %c0_18 = arith.constant 0 : index
    %c0_19 = arith.constant 0 : index
    %25 = vector.load %arg8[%c0_18, %c0_19] : memref<32x8xbf16, #tpu.memory_space<vmem>>, vector<32x8xbf16>
    %cst_20 = arith.constant dense<0.000000e+00> : vector<112x8xf32>
    %26 = tpu.matmul %24, %25, %cst_20 {dimension_numbers = #tpu.dot_dimension_numbers<[1], [0], [0], [1], [0, 0, 1, 1], [], []>} : vector<112x32xbf16>, vector<32x8xbf16>, vector<112x8xf32> -> vector<112x8xf32>
    %c0_21 = arith.constant 0 : index
    %c0_22 = arith.constant 0 : index
    %27 = vector.load %arg9[%c0_21, %c0_22] : memref<1x8xf32, #tpu.memory_space<vmem>>, vector<1x8xf32>
    %28 = vector.broadcast %27 : vector<1x8xf32> to vector<112x8xf32>
    %29 = arith.addf %26, %28 : vector<112x8xf32>
    %c0_23 = arith.constant 0 : index
    %c0_24 = arith.constant 0 : index
    %30 = vector.load %arg10[%c0_23, %c0_24] : memref<112x8xf32, #tpu.memory_space<vmem>>, vector<112x8xf32>
    tpu.vector_store %arg10[%c0_23, %c0_24], %29 {strides = array<i32>} : memref<112x8xf32, #tpu.memory_space<vmem>>, vector<112x8xf32>,
    return
  }
  func.func @transform_0(%arg0: i32) -> (i32, i32) {
    %c0_i32 = arith.constant 0 : i32
    %c0_i32_0 = arith.constant 0 : i32
    return %arg0, %c0_i32 : i32, i32
  }
  func.func @transform_1(%arg0: i32) -> (i32, i32) {
    %c0_i32 = arith.constant 0 : i32
    %c0_i32_0 = arith.constant 0 : i32
    %c0_i32_1 = arith.constant 0 : i32
    return %c0_i32, %c0_i32_0 : i32, i32
  }
  func.func @transform_2(%arg0: i32) -> (i32, i32) {
    %c0_i32 = arith.constant 0 : i32
    %c0_i32_0 = arith.constant 0 : i32
    %c0_i32_1 = arith.constant 0 : i32
    return %c0_i32, %c0_i32_0 : i32, i32
  }
  func.func @transform_3(%arg0: i32) -> (i32, i32) {
    %c0_i32 = arith.constant 0 : i32
    %c0_i32_0 = arith.constant 0 : i32
    %c0_i32_1 = arith.constant 0 : i32
    return %c0_i32, %c0_i32_0 : i32, i32
  }
  func.func @transform_4(%arg0: i32) -> (i32, i32) {
    %c0_i32 = arith.constant 0 : i32
    %c0_i32_0 = arith.constant 0 : i32
    %c0_i32_1 = arith.constant 0 : i32
    return %c0_i32, %c0_i32_0 : i32, i32
  }
  func.func @transform_5(%arg0: i32) -> (i32, i32) {
    %c0_i32 = arith.constant 0 : i32
    %c0_i32_0 = arith.constant 0 : i32
    %c0_i32_1 = arith.constant 0 : i32
    return %c0_i32, %c0_i32_0 : i32, i32
  }
  func.func @transform_6(%arg0: i32) -> (i32, i32) {
    %c0_i32 = arith.constant 0 : i32
    %c0_i32_0 = arith.constant 0 : i32
    %c0_i32_1 = arith.constant 0 : i32
    return %c0_i32, %c0_i32_0 : i32, i32
  }
  func.func @transform_7(%arg0: i32) -> (i32, i32) {
    %c0_i32 = arith.constant 0 : i32
    %c0_i32_0 = arith.constant 0 : i32
    %c0_i32_1 = arith.constant 0 : i32
    return %c0_i32, %c0_i32_0 : i32, i32
  }
  func.func @transform_8(%arg0: i32) -> (i32, i32) {
    %c0_i32 = arith.constant 0 : i32
    %c0_i32_0 = arith.constant 0 : i32
    %c0_i32_1 = arith.constant 0 : i32
    return %c0_i32, %c0_i32_0 : i32, i32
  }
  func.func @transform_9(%arg0: i32) -> (i32, i32) {
    %c0_i32 = arith.constant 0 : i32
    %c0_i32_0 = arith.constant 0 : i32
    return %arg0, %c0_i32 : i32, i32
  }
}

module attributes {stable_mosaic.version = 11 : i64} {
  func.func @_mlp_kernel(%arg0: i32, %arg1: memref<112x16xbf16, #tpu.memory_space<vmem>>, %arg2: memref<16x32xbf16, #tpu.memory_space<vmem>>, %arg3: memref<1x32xf32, #tpu.memory_space<vmem>>, %arg4: memref<32x32xbf16, #tpu.memory_space<vmem>>, %arg5: memref<1x32xf32, #tpu.memory_space<vmem>>, %arg6: memref<32x32xbf16, #tpu.memory_space<vmem>>, %arg7: memref<1x32xf32, #tpu.memory_space<vmem>>, %arg8: memref<32x8xbf16, #tpu.memory_space<vmem>>, %arg9: memref<1x8xf32, #tpu.memory_space<vmem>>, %arg10: memref<112x8xf32, #tpu.memory_space<vmem>>) attributes {dimension_semantics = [#tpu.dimension_semantics<parallel>], iteration_bounds = array<i64: 1>, scalar_prefetch = 0 : i64, scratch_operands = 0 : i64, tpu.core_type = #tpu.core_type<tc>, window_params = [{transform_indices = @transform_0, window_bounds = array<i64: 112, 16>}, {pipeline_mode = #tpu.pipeline_mode<synchronous>, transform_indices = @transform_1, window_bounds = array<i64: 16, 32>}, {pipeline_mode = #tpu.pipeline_mode<synchronous>, transform_indices = @transform_2, window_bounds = array<i64: 1, 32>}, {pipeline_mode = #tpu.pipeline_mode<synchronous>, transform_indices = @transform_3, window_bounds = array<i64: 32, 32>}, {pipeline_mode = #tpu.pipeline_mode<synchronous>, transform_indices = @transform_4, window_bounds = array<i64: 1, 32>}, {pipeline_mode = #tpu.pipeline_mode<synchronous>, transform_indices = @transform_5, window_bounds = array<i64: 32, 32>}, {pipeline_mode = #tpu.pipeline_mode<synchronous>, transform_indices = @transform_6, window_bounds = array<i64: 1, 32>}, {pipeline_mode = #tpu.pipeline_mode<synchronous>, transform_indices = @transform_7, window_bounds = array<i64: 32, 8>}, {pipeline_mode = #tpu.pipeline_mode<synchronous>, transform_indices = @transform_8, window_bounds = array<i64: 1, 8>}, {transform_indices = @transform_9, window_bounds = array<i64: 112, 8>}]} {
    %c0 = arith.constant 0 : index
    %c0_0 = arith.constant 0 : index
    %0 = vector.load %arg1[%c0, %c0_0] : memref<112x16xbf16, #tpu.memory_space<vmem>>, vector<112x16xbf16>
    %c0_1 = arith.constant 0 : index
    %c0_2 = arith.constant 0 : index
    %1 = vector.load %arg2[%c0_1, %c0_2] : memref<16x32xbf16, #tpu.memory_space<vmem>>, vector<16x32xbf16>
    %cst = arith.constant dense<0.000000e+00> : vector<112x32xf32>
    %2 = tpu.matmul %0, %1, %cst {dimension_numbers = #tpu.dot_dimension_numbers<[1], [0], [0], [1], [0, 0, 1, 1], [], []>} : vector<112x16xbf16>, vector<16x32xbf16>, vector<112x32xf32> -> vector<112x32xf32>
    %c0_3 = arith.constant 0 : index
    %c0_4 = arith.constant 0 : index
    %3 = vector.load %arg3[%c0_3, %c0_4] : memref<1x32xf32, #tpu.memory_space<vmem>>, vector<1x32xf32>
    %4 = vector.broadcast %3 : vector<1x32xf32> to vector<112x32xf32>
    %5 = arith.addf %2, %4 : vector<112x32xf32>
    %cst_5 = arith.constant 0.000000e+00 : f32
    %6 = vector.broadcast %cst_5 : f32 to vector<112x32xf32>
    %7 = arith.maximumf %5, %6 : vector<112x32xf32>
    %8 = arith.truncf %7 : vector<112x32xf32> to vector<112x32xbf16>
    %c0_6 = arith.constant 0 : index
    %c0_7 = arith.constant 0 : index
    %9 = vector.load %arg4[%c0_6, %c0_7] : memref<32x32xbf16, #tpu.memory_space<vmem>>, vector<32x32xbf16>
    %cst_8 = arith.constant dense<0.000000e+00> : vector<112x32xf32>
    %10 = tpu.matmul %8, %9, %cst_8 {dimension_numbers = #tpu.dot_dimension_numbers<[1], [0], [0], [1], [0, 0, 1, 1], [], []>} : vector<112x32xbf16>, vector<32x32xbf16>, vector<112x32xf32> -> vector<112x32xf32>
    %c0_9 = arith.constant 0 : index
    %c0_10 = arith.constant 0 : index
    %11 = vector.load %arg5[%c0_9, %c0_10] : memref<1x32xf32, #tpu.memory_space<vmem>>, vector<1x32xf32>
    %12 = vector.broadcast %11 : vector<1x32xf32> to vector<112x32xf32>
    %13 = arith.addf %10, %12 : vector<112x32xf32>
    %cst_11 = arith.constant 0.000000e+00 : f32
    %14 = vector.broadcast %cst_11 : f32 to vector<112x32xf32>
    %15 = arith.maximumf %13, %14 : vector<112x32xf32>
    %16 = arith.truncf %15 : vector<112x32xf32> to vector<112x32xbf16>
    %c0_12 = arith.constant 0 : index
    %c0_13 = arith.constant 0 : index
    %17 = vector.load %arg6[%c0_12, %c0_13] : memref<32x32xbf16, #tpu.memory_space<vmem>>, vector<32x32xbf16>
    %cst_14 = arith.constant dense<0.000000e+00> : vector<112x32xf32>
    %18 = tpu.matmul %16, %17, %cst_14 {dimension_numbers = #tpu.dot_dimension_numbers<[1], [0], [0], [1], [0, 0, 1, 1], [], []>} : vector<112x32xbf16>, vector<32x32xbf16>, vector<112x32xf32> -> vector<112x32xf32>
    %c0_15 = arith.constant 0 : index
    %c0_16 = arith.constant 0 : index
    %19 = vector.load %arg7[%c0_15, %c0_16] : memref<1x32xf32, #tpu.memory_space<vmem>>, vector<1x32xf32>
    %20 = vector.broadcast %19 : vector<1x32xf32> to vector<112x32xf32>
    %21 = arith.addf %18, %20 : vector<112x32xf32>
    %cst_17 = arith.constant 0.000000e+00 : f32
    %22 = vector.broadcast %cst_17 : f32 to vector<112x32xf32>
    %23 = arith.maximumf %21, %22 : vector<112x32xf32>
    %24 = arith.truncf %23 : vector<112x32xf32> to vector<112x32xbf16>
    %c0_18 = arith.constant 0 : index
    %c0_19 = arith.constant 0 : index
    %25 = vector.load %arg8[%c0_18, %c0_19] : memref<32x8xbf16, #tpu.memory_space<vmem>>, vector<32x8xbf16>
    %cst_20 = arith.constant dense<0.000000e+00> : vector<112x8xf32>
    %26 = tpu.matmul %24, %25, %cst_20 {dimension_numbers = #tpu.dot_dimension_numbers<[1], [0], [0], [1], [0, 0, 1, 1], [], []>} : vector<112x32xbf16>, vector<32x8xbf16>, vector<112x8xf32> -> vector<112x8xf32>
    %c0_21 = arith.constant 0 : index
    %c0_22 = arith.constant 0 : index
    %27 = vector.load %arg9[%c0_21, %c0_22] : memref<1x8xf32, #tpu.memory_space<vmem>>, vector<1x8xf32>
    %28 = vector.broadcast %27 : vector<1x8xf32> to vector<112x8xf32>
    %29 = arith.addf %26, %28 : vector<112x8xf32>
    %c0_23 = arith.constant 0 : index
    %c0_24 = arith.constant 0 : index
    %30 = vector.load %arg10[%c0_23, %c0_24] : memref<112x8xf32, #tpu.memory_space<vmem>>, vector<112x8xf32>
    tpu.vector_store %arg10[%c0_23, %c0_24], %29 {strides = array<i32>} : memref<112x8xf32, #tpu.memory_space<vmem>>, vector<112x8xf32>,
    return
  }
  func.func @transform_0(%arg0: i32) -> (i32, i32) {
    %c0_i32 = arith.constant 0 : i32
    %c0_i32_0 = arith.constant 0 : i32
    return %arg0, %c0_i32 : i32, i32
  }
  func.func @transform_1(%arg0: i32) -> (i32, i32) {
    %c0_i32 = arith.constant 0 : i32
    %c0_i32_0 = arith.constant 0 : i32
    %c0_i32_1 = arith.constant 0 : i32
    return %c0_i32, %c0_i32_0 : i32, i32
  }
  func.func @transform_2(%arg0: i32) -> (i32, i32) {
    %c0_i32 = arith.constant 0 : i32
    %c0_i32_0 = arith.constant 0 : i32
    %c0_i32_1 = arith.constant 0 : i32
    return %c0_i32, %c0_i32_0 : i32, i32
  }
  func.func @transform_3(%arg0: i32) -> (i32, i32) {
    %c0_i32 = arith.constant 0 : i32
    %c0_i32_0 = arith.constant 0 : i32
    %c0_i32_1 = arith.constant 0 : i32
    return %c0_i32, %c0_i32_0 : i32, i32
  }
  func.func @transform_4(%arg0: i32) -> (i32, i32) {
    %c0_i32 = arith.constant 0 : i32
    %c0_i32_0 = arith.constant 0 : i32
    %c0_i32_1 = arith.constant 0 : i32
    return %c0_i32, %c0_i32_0 : i32, i32
  }
  func.func @transform_5(%arg0: i32) -> (i32, i32) {
    %c0_i32 = arith.constant 0 : i32
    %c0_i32_0 = arith.constant 0 : i32
    %c0_i32_1 = arith.constant 0 : i32
    return %c0_i32, %c0_i32_0 : i32, i32
  }
  func.func @transform_6(%arg0: i32) -> (i32, i32) {
    %c0_i32 = arith.constant 0 : i32
    %c0_i32_0 = arith.constant 0 : i32
    %c0_i32_1 = arith.constant 0 : i32
    return %c0_i32, %c0_i32_0 : i32, i32
  }
  func.func @transform_7(%arg0: i32) -> (i32, i32) {
    %c0_i32 = arith.constant 0 : i32
    %c0_i32_0 = arith.constant 0 : i32
    %c0_i32_1 = arith.constant 0 : i32
    return %c0_i32, %c0_i32_0 : i32, i32
  }
  func.func @transform_8(%arg0: i32) -> (i32, i32) {
    %c0_i32 = arith.constant 0 : i32
    %c0_i32_0 = arith.constant 0 : i32
    %c0_i32_1 = arith.constant 0 : i32
    return %c0_i32, %c0_i32_0 : i32, i32
  }
  func.func @transform_9(%arg0: i32) -> (i32, i32) {
    %c0_i32 = arith.constant 0 : i32
    %c0_i32_0 = arith.constant 0 : i32
    return %arg0, %c0_i32 : i32, i32
  }
}

</mosaic_0001>

<llo_original>
// kernel: tpu_custom_call.1
$region0: #{tpu_custom_call.1}
  #allocation0 [shape = 'u32[]', space=smem, size = 0x4, offset = 0x4, fixed_abs, tag = 'smem constant byte address 0x4 - core index']
  #allocation1 [shape = 'u32[144,128]{1,0:T(1,128)}', space=vmem, size = 0x12000, scoped, tag = 'internal scratch']
  %s0 = inlined_call_operand.vmem [shape: bf16[100,16], index: 0, kind: input, shape index: {}]
  %s1 = inlined_call_operand.vmem [shape: bf16[16,32], index: 1, kind: input, shape index: {}]
  %s2 = inlined_call_operand.vmem [shape: f32[1,32], index: 2, kind: input, shape index: {}]
  %s3 = inlined_call_operand.vmem [shape: bf16[32,32], index: 3, kind: input, shape index: {}]
  %s4 = inlined_call_operand.vmem [shape: f32[1,32], index: 4, kind: input, shape index: {}]
  %s5 = inlined_call_operand.vmem [shape: bf16[32,32], index: 5, kind: input, shape index: {}]
  %s6 = inlined_call_operand.vmem [shape: f32[1,32], index: 6, kind: input, shape index: {}]
  %s7 = inlined_call_operand.vmem [shape: bf16[32,8], index: 7, kind: input, shape index: {}]
  %s8 = inlined_call_operand.vmem [shape: f32[1,8], index: 8, kind: input, shape index: {}]
  %s9 = inlined_call_operand.vmem [shape: f32[100,8], index: 9, kind: output, shape index: {}]
  %s10 = sld [smem:[#allocation0]]
  $region80: #{tpu_custom_call.1} parent=0
    _
  %s12 = ssub.s32 1, %s10
  %s13 = scalar_select 0, %s12, %s10
  $region1: #{tpu_custom_call.1} parent=0
    #allocation2 [shape = 'u8[57344]{0}', space=vmem, size = 0xe000, scoped, tag = 'output window, operand 0, single buffered']
    // Predicated region
    $region2: #{tpu_custom_call.1} parent=1 // pred_check
      _
    $region3: #{tpu_custom_call.1} parent=1 // pred_check_branch
      %15 = sbr.rel (0) target = $region5
    $region4: #{tpu_custom_call.1} parent=1 // pred_region
      _
    $region5: #{tpu_custom_call.1} parent=1 // pred_fallthru
      _
    // Predicated region
    $region6: #{tpu_custom_call.1} parent=1 // pred_check
      _
    $region7: #{tpu_custom_call.1} parent=1 // pred_check_branch
      %17 = sbr.rel (0) target = $region9
    $region8: #{tpu_custom_call.1} parent=1 // pred_region
      _
    $region9: #{tpu_custom_call.1} parent=1 // pred_fallthru
      _
    // Predicated region
    $region10: #{tpu_custom_call.1} parent=1 // pred_check
      _
    $region11: #{tpu_custom_call.1} parent=1 // pred_check_branch
      %19 = sbr.rel (0) target = $region13
    $region12: #{tpu_custom_call.1} parent=1 // pred_region
      _
    $region13: #{tpu_custom_call.1} parent=1 // pred_fallthru
      _
    // Predicated region
    $region14: #{tpu_custom_call.1} parent=1 // pred_check
      _
    $region15: #{tpu_custom_call.1} parent=1 // pred_check_branch
      %21 = sbr.rel (0) target = $region17
    $region16: #{tpu_custom_call.1} parent=1 // pred_region
      _
    $region17: #{tpu_custom_call.1} parent=1 // pred_fallthru
      _
    // Predicated region
    $region18: #{tpu_custom_call.1} parent=1 // pred_check
      _
    $region19: #{tpu_custom_call.1} parent=1 // pred_check_branch
      %23 = sbr.rel (0) target = $region21
    $region20: #{tpu_custom_call.1} parent=1 // pred_region
      _
    $region21: #{tpu_custom_call.1} parent=1 // pred_fallthru
      _
    // Predicated region
    $region22: #{tpu_custom_call.1} parent=1 // pred_check
      _
    $region23: #{tpu_custom_call.1} parent=1 // pred_check_branch
      %25 = sbr.rel (0) target = $region25
    $region24: #{tpu_custom_call.1} parent=1 // pred_region
      _
    $region25: #{tpu_custom_call.1} parent=1 // pred_fallthru
      _
    // Predicated region
    $region26: #{tpu_custom_call.1} parent=1 // pred_check
      _
    $region27: #{tpu_custom_call.1} parent=1 // pred_check_branch
      %27 = sbr.rel (0) target = $region29
    $region28: #{tpu_custom_call.1} parent=1 // pred_region
      _
    $region29: #{tpu_custom_call.1} parent=1 // pred_fallthru
      _
    // Predicated region
    $region30: #{tpu_custom_call.1} parent=1 // pred_check
      _
    $region31: #{tpu_custom_call.1} parent=1 // pred_check_branch
      %29 = sbr.rel (0) target = $region33
    $region32: #{tpu_custom_call.1} parent=1 // pred_region
      _
    $region33: #{tpu_custom_call.1} parent=1 // pred_fallthru
      _
    // Predicated region
    $region34: #{tpu_custom_call.1} parent=1 // pred_check
      _
    $region35: #{tpu_custom_call.1} parent=1 // pred_check_branch
      %31 = sbr.rel (0) target = $region37
    $region36: #{tpu_custom_call.1} parent=1 // pred_region
      _
    $region37: #{tpu_custom_call.1} parent=1 // pred_fallthru
      _
    %v33 = vld [vmem:[%s0] sm:$0xf]
    %v34 = vld [vmem:[%s0 + $0x4] sm:$0xf]
    %v35 = vld [vmem:[%s0 + $0x8] sm:$0xf]
    %v36 = vld [vmem:[%s0 + $0xc] sm:$0xf]
    %v37 = vld [vmem:[%s0 + $0x10] sm:$0xf]
    %v38 = vld [vmem:[%s0 + $0x14] sm:$0xf]
    %v39 = vld [vmem:[%s0 + $0x18] sm:$0xf]
    %v40 = vld [vmem:[%s0 + $0x1c] sm:$0xf]
    %v41 = vld [vmem:[%s0 + $0x20] sm:$0xf]
    %v42 = vld [vmem:[%s0 + $0x24] sm:$0xf]
    %v43 = vld [vmem:[%s0 + $0x28] sm:$0xf]
    %v44 = vld [vmem:[%s0 + $0x2c] sm:$0xf]
    %v45 = vld [vmem:[%s0 + $0x30] sm:$0xf]
    %v46 = vld [vmem:[%s0 + $0x34] sm:$0xf]
    %v47 = vld [vmem:[%s1] sm:$0xf]
    %v48 = vld [vmem:[%s1 + $0x4] sm:$0xf]
    %v49 = vld [vmem:[%s2] sm:$0x1]
    %v51 = vlaneseq
    %v52 = vshrl.u32 %v51, 7
    %v53 = vsub.s32 0, %v52
    %v54 = vrot.slane %v49, %v53
    %v70 = vunpack.c.l.b16 %v33
    %v71 = vunpack.c.l.b16 %v34
    %v72 = vunpack.c.l.b16 %v35
    %v73 = vunpack.c.l.b16 %v36
    %v74 = vunpack.c.l.b16 %v37
    %v75 = vunpack.c.l.b16 %v38
    %v76 = vunpack.c.l.b16 %v39
    %v77 = vunpack.c.l.b16 %v40
    %v78 = vunpack.c.l.b16 %v41
    %v79 = vunpack.c.l.b16 %v42
    %v80 = vunpack.c.l.b16 %v43
    %v81 = vunpack.c.l.b16 %v44
    %v82 = vunpack.c.l.b16 %v45
    %v83 = vunpack.c.l.b16 %v46
    %v84 = vpack.c.b16 %v71, %v70
    %v85 = vpack.c.b16 %v73, %v72
    %v86 = vpack.c.b16 %v75, %v74
    %v87 = vpack.c.b16 %v77, %v76
    %v88 = vpack.c.b16 %v79, %v78
    %v89 = vpack.c.b16 %v81, %v80
    %v90 = vpack.c.b16 %v83, %v82
    %v93 = vunpack.c.l.b16 %v47
    %v94 = vunpack.c.l.b16 %v48
    %v95 = vpack.c.b16 %v94, %v93
    %vm97 = vcmask 130048
    %v99 = vsel %vm97, %v84, 0
    %v102 = vsel %vm97, %v85, 0
    %v105 = vsel %vm97, %v86, 0
    %v108 = vsel %vm97, %v87, 0
    %v111 = vsel %vm97, %v88, 0
    %v114 = vsel %vm97, %v89, 0
    %v117 = vsel %vm97, %v90, 0
    %119 = vmatprep.subr.bf16.mxu0 0
    %120 = vmatpush1.bf16.msra.mxu0 %v95
    %121 = vmatprep.subr.bf16.mxu0 0
    %122 = vmatpush1.bf16.msra.mxu0 0
    %123 = vmatprep.subr.bf16.mxu0 0
    %124 = vmatpush1.bf16.msra.mxu0 0
    %125 = vmatprep.subr.bf16.mxu0 0
    %126 = vmatpush1.bf16.msra.mxu0 0
    %127 = vmatprep.subr.bf16.mxu0 0
    %128 = vmatpush1.bf16.msra.mxu0 0
    %129 = vmatprep.subr.bf16.mxu0 0
    %130 = vmatpush1.bf16.msra.mxu0 0
    %131 = vmatprep.subr.bf16.mxu0 0
    %132 = vmatpush1.bf16.msra.mxu0 0
    %133 = vmatprep.subr.bf16.mxu0 0
    %134 = vmatpush1.bf16.msra.mxu0 0
    %135 = vmatprep.subr.bf16.mxu0 0
    %136 = vmatpush1.bf16.msra.mxu0 0
    %137 = vmatprep.subr.bf16.mxu0 0
    %138 = vmatpush1.bf16.msra.mxu0 0
    %139 = vmatprep.subr.bf16.mxu0 0
    %140 = vmatpush1.bf16.msra.mxu0 0
    %141 = vmatprep.subr.bf16.mxu0 0
    %142 = vmatpush1.bf16.msra.mxu0 0
    %143 = vmatprep.subr.bf16.mxu0 0
    %144 = vmatpush1.bf16.msra.mxu0 0
    %145 = vmatprep.subr.bf16.mxu0 0
    %146 = vmatpush1.bf16.msra.mxu0 0
    %147 = vmatprep.subr.bf16.mxu0 0
    %148 = vmatpush1.bf16.msra.mxu0 0
    %149 = vmatprep.subr.bf16.mxu0 0
    %150 = vmatpush1.bf16.msra.mxu0 0
    %151 = vmatprep.mubr.bf16.mxu0 0
    %152 = vmatmul.mubr.bf16.gmra.mrb[0].mxu0 %v99
    %v153 = vpop.f32.mrb[0].mxu0
    %v154 = vadd.f32 %v54, %v153
    %v155 = vpop.f32.mrb[0].mxu0
    %v156 = vpop.f32.mrb[0].mxu0
    %v157 = vadd.f32 %v54, %v156
    %v158 = vpop.f32.mrb[0].mxu0
    %159 = vmatprep.mubr.bf16.mxu0 0
    %160 = vmatmul.mubr.bf16.gmra.mrb[0].mxu0 %v102
    %v161 = vpop.f32.mrb[0].mxu0
    %v162 = vadd.f32 %v54, %v161
    %v163 = vpop.f32.mrb[0].mxu0
    %v164 = vpop.f32.mrb[0].mxu0
    %v165 = vadd.f32 %v54, %v164
    %v166 = vpop.f32.mrb[0].mxu0
    %167 = vmatprep.mubr.bf16.mxu0 0
    %168 = vmatmul.mubr.bf16.gmra.mrb[0].mxu0 %v105
    %v169 = vpop.f32.mrb[0].mxu0
    %v170 = vadd.f32 %v54, %v169
    %v171 = vpop.f32.mrb[0].mxu0
    %v172 = vpop.f32.mrb[0].mxu0
    %v173 = vadd.f32 %v54, %v172
    %v174 = vpop.f32.mrb[0].mxu0
    %175 = vmatprep.mubr.bf16.mxu0 0
    %176 = vmatmul.mubr.bf16.gmra.mrb[0].mxu0 %v108
    %v177 = vpop.f32.mrb[0].mxu0
    %v178 = vadd.f32 %v54, %v177
    %v179 = vpop.f32.mrb[0].mxu0
    %v180 = vpop.f32.mrb[0].mxu0
    %v181 = vadd.f32 %v54, %v180
    %v182 = vpop.f32.mrb[0].mxu0
    %183 = vmatprep.mubr.bf16.mxu0 0
    %184 = vmatmul.mubr.bf16.gmra.mrb[0].mxu0 %v111
    %v185 = vpop.f32.mrb[0].mxu0
    %v186 = vadd.f32 %v54, %v185
    %v187 = vpop.f32.mrb[0].mxu0
    %v188 = vpop.f32.mrb[0].mxu0
    %v189 = vadd.f32 %v54, %v188
    %v190 = vpop.f32.mrb[0].mxu0
    %191 = vmatprep.mubr.bf16.mxu0 0
    %192 = vmatmul.mubr.bf16.gmra.mrb[0].mxu0 %v114
    %v193 = vpop.f32.mrb[0].mxu0
    %v194 = vadd.f32 %v54, %v193
    %v195 = vpop.f32.mrb[0].mxu0
    %v196 = vpop.f32.mrb[0].mxu0
    %v197 = vadd.f32 %v54, %v196
    %v198 = vpop.f32.mrb[0].mxu0
    %199 = vmatprep.mubr.bf16.mxu0 0
    %200 = vmatmul.mubr.bf16.gmra.mrb[0].mxu0 %v117
    %v201 = vpop.f32.mrb[0].mxu0
    %v202 = vadd.f32 %v54, %v201
    %v203 = vpop.f32.mrb[0].mxu0
    %v204 = vpop.f32.mrb[0].mxu0
    %v205 = vadd.f32 %v54, %v204
    %v206 = vpop.f32.mrb[0].mxu0
    %207 = vdwg.mxu0
    %v208 = vmax.f32 %v154, 0.0
    %v209 = vmax.f32 %v157, 0.0
    %v210 = vmax.f32 %v162, 0.0
    %v211 = vmax.f32 %v165, 0.0
    %v212 = vmax.f32 %v170, 0.0
    %v213 = vmax.f32 %v173, 0.0
    %v214 = vmax.f32 %v178, 0.0
    %v215 = vmax.f32 %v181, 0.0
    %v216 = vmax.f32 %v186, 0.0
    %v217 = vmax.f32 %v189, 0.0
    %v218 = vmax.f32 %v194, 0.0
    %v219 = vmax.f32 %v197, 0.0
    %v220 = vmax.f32 %v202, 0.0
    %v221 = vmax.f32 %v205, 0.0
    %v222 = vpack.c.bf16 %v209, %v208
    %v223 = vpack.c.bf16 %v211, %v210
    %v224 = vpack.c.bf16 %v213, %v212
    %v225 = vpack.c.bf16 %v215, %v214
    %v226 = vpack.c.bf16 %v217, %v216
    %v227 = vpack.c.bf16 %v219, %v218
    %v228 = vpack.c.bf16 %v221, %v220
    %v229 = vld [vmem:[%s3] sm:$0xf]
    %v230 = vld [vmem:[%s3 + $0x4] sm:$0xf]
    %v231 = vld [vmem:[%s3 + $0x8] sm:$0xf]
    %v232 = vld [vmem:[%s3 + $0xc] sm:$0xf]
    %v233 = vld [vmem:[%s4] sm:$0x1]
    %v235 = vlaneseq
    %v236 = vshrl.u32 %v235, 7
    %v237 = vsub.s32 0, %v236
    %v238 = vrot.slane %v233, %v237
    %v244 = vunpack.c.l.b16 %v229
    %v245 = vunpack.c.l.b16 %v230
    %v246 = vunpack.c.l.b16 %v231
    %v247 = vunpack.c.l.b16 %v232
    %v248 = vpack.c.b16 %v245, %v244
    %v249 = vpack.c.b16 %v247, %v246
    %vm252 = vcmask 261120
    %v254 = vsel %vm252, %v222, 0
    %v257 = vsel %vm252, %v223, 0
    %v260 = vsel %vm252, %v224, 0
    %v263 = vsel %vm252, %v225, 0
    %v266 = vsel %vm252, %v226, 0
    %v269 = vsel %vm252, %v227, 0
    %v272 = vsel %vm252, %v228, 0
    %274 = vmatprep.subr.bf16.mxu0 0
    %275 = vmatpush1.bf16.msra.mxu0 %v248
    %276 = vmatprep.subr.bf16.mxu0 0
    %277 = vmatpush1.bf16.msra.mxu0 %v249
    %278 = vmatprep.subr.bf16.mxu0 0
    %279 = vmatpush1.bf16.msra.mxu0 0
    %280 = vmatprep.subr.bf16.mxu0 0
    %281 = vmatpush1.bf16.msra.mxu0 0
    %282 = vmatprep.subr.bf16.mxu0 0
    %283 = vmatpush1.bf16.msra.mxu0 0
    %284 = vmatprep.subr.bf16.mxu0 0
    %285 = vmatpush1.bf16.msra.mxu0 0
    %286 = vmatprep.subr.bf16.mxu0 0
    %287 = vmatpush1.bf16.msra.mxu0 0
    %288 = vmatprep.subr.bf16.mxu0 0
    %289 = vmatpush1.bf16.msra.mxu0 0
    %290 = vmatprep.subr.bf16.mxu0 0
    %291 = vmatpush1.bf16.msra.mxu0 0
    %292 = vmatprep.subr.bf16.mxu0 0
    %293 = vmatpush1.bf16.msra.mxu0 0
    %294 = vmatprep.subr.bf16.mxu0 0
    %295 = vmatpush1.bf16.msra.mxu0 0
    %296 = vmatprep.subr.bf16.mxu0 0
    %297 = vmatpush1.bf16.msra.mxu0 0
    %298 = vmatprep.subr.bf16.mxu0 0
    %299 = vmatpush1.bf16.msra.mxu0 0
    %300 = vmatprep.subr.bf16.mxu0 0
    %301 = vmatpush1.bf16.msra.mxu0 0
    %302 = vmatprep.subr.bf16.mxu0 0
    %303 = vmatpush1.bf16.msra.mxu0 0
    %304 = vmatprep.subr.bf16.mxu0 0
    %305 = vmatpush1.bf16.msra.mxu0 0
    %306 = vmatprep.mubr.bf16.mxu0 0
    %307 = vmatmul.mubr.bf16.gmra.mrb[0].mxu0 %v254
    %v308 = vpop.f32.mrb[0].mxu0
    %v309 = vadd.f32 %v238, %v308
    %v310 = vpop.f32.mrb[0].mxu0
    %v311 = vpop.f32.mrb[0].mxu0
    %v312 = vadd.f32 %v238, %v311
    %v313 = vpop.f32.mrb[0].mxu0
    %314 = vmatprep.mubr.bf16.mxu0 0
    %315 = vmatmul.mubr.bf16.gmra.mrb[0].mxu0 %v257
    %v316 = vpop.f32.mrb[0].mxu0
    %v317 = vadd.f32 %v238, %v316
    %v318 = vpop.f32.mrb[0].mxu0
    %v319 = vpop.f32.mrb[0].mxu0
    %v320 = vadd.f32 %v238, %v319
    %v321 = vpop.f32.mrb[0].mxu0
    %322 = vmatprep.mubr.bf16.mxu0 0
    %323 = vmatmul.mubr.bf16.gmra.mrb[0].mxu0 %v260
    %v324 = vpop.f32.mrb[0].mxu0
    %v325 = vadd.f32 %v238, %v324
    %v326 = vpop.f32.mrb[0].mxu0
    %v327 = vpop.f32.mrb[0].mxu0
    %v328 = vadd.f32 %v238, %v327
    %v329 = vpop.f32.mrb[0].mxu0
    %330 = vmatprep.mubr.bf16.mxu0 0
    %331 = vmatmul.mubr.bf16.gmra.mrb[0].mxu0 %v263
    %v332 = vpop.f32.mrb[0].mxu0
    %v333 = vadd.f32 %v238, %v332
    %v334 = vpop.f32.mrb[0].mxu0
    %v335 = vpop.f32.mrb[0].mxu0
    %v336 = vadd.f32 %v238, %v335
    %v337 = vpop.f32.mrb[0].mxu0
    %338 = vmatprep.mubr.bf16.mxu0 0
    %339 = vmatmul.mubr.bf16.gmra.mrb[0].mxu0 %v266
    %v340 = vpop.f32.mrb[0].mxu0
    %v341 = vadd.f32 %v238, %v340
    %v342 = vpop.f32.mrb[0].mxu0
    %v343 = vpop.f32.mrb[0].mxu0
    %v344 = vadd.f32 %v238, %v343
    %v345 = vpop.f32.mrb[0].mxu0
    %346 = vmatprep.mubr.bf16.mxu0 0
    %347 = vmatmul.mubr.bf16.gmra.mrb[0].mxu0 %v269
    %v348 = vpop.f32.mrb[0].mxu0
    %v349 = vadd.f32 %v238, %v348
    %v350 = vpop.f32.mrb[0].mxu0
    %v351 = vpop.f32.mrb[0].mxu0
    %v352 = vadd.f32 %v238, %v351
    %v353 = vpop.f32.mrb[0].mxu0
    %354 = vmatprep.mubr.bf16.mxu0 0
    %355 = vmatmul.mubr.bf16.gmra.mrb[0].mxu0 %v272
    %v356 = vpop.f32.mrb[0].mxu0
    %v357 = vadd.f32 %v238, %v356
    %v358 = vpop.f32.mrb[0].mxu0
    %v359 = vpop.f32.mrb[0].mxu0
    %v360 = vadd.f32 %v238, %v359
    %v361 = vpop.f32.mrb[0].mxu0
    %362 = vdwg.mxu0
    %v363 = vmax.f32 %v309, 0.0
    %v364 = vmax.f32 %v312, 0.0
    %v365 = vmax.f32 %v317, 0.0
    %v366 = vmax.f32 %v320, 0.0
    %v367 = vmax.f32 %v325, 0.0
    %v368 = vmax.f32 %v328, 0.0
    %v369 = vmax.f32 %v333, 0.0
    %v370 = vmax.f32 %v336, 0.0
    %v371 = vmax.f32 %v341, 0.0
    %v372 = vmax.f32 %v344, 0.0
    %v373 = vmax.f32 %v349, 0.0
    %v374 = vmax.f32 %v352, 0.0
    %v375 = vmax.f32 %v357, 0.0
    %v376 = vmax.f32 %v360, 0.0
    %v377 = vpack.c.bf16 %v364, %v363
    %v378 = vpack.c.bf16 %v366, %v365
    %v379 = vpack.c.bf16 %v368, %v367
    %v380 = vpack.c.bf16 %v370, %v369
    %v381 = vpack.c.bf16 %v372, %v371
    %v382 = vpack.c.bf16 %v374, %v373
    %v383 = vpack.c.bf16 %v376, %v375
    %v384 = vld [vmem:[%s5] sm:$0xf]
    %v385 = vld [vmem:[%s5 + $0x4] sm:$0xf]
    %v386 = vld [vmem:[%s5 + $0x8] sm:$0xf]
    %v387 = vld [vmem:[%s5 + $0xc] sm:$0xf]
    %v388 = vld [vmem:[%s6] sm:$0x1]
    %v390 = vlaneseq
    %v391 = vshrl.u32 %v390, 7
    %v392 = vsub.s32 0, %v391
    %v393 = vrot.slane %v388, %v392
    %v399 = vunpack.c.l.b16 %v384
    %v400 = vunpack.c.l.b16 %v385
    %v401 = vunpack.c.l.b16 %v386
    %v402 = vunpack.c.l.b16 %v387
    %v403 = vpack.c.b16 %v400, %v399
    %v404 = vpack.c.b16 %v402, %v401
    %v408 = vsel %vm252, %v377, 0
    %v411 = vsel %vm252, %v378, 0
    %v414 = vsel %vm252, %v379, 0
    %v417 = vsel %vm252, %v380, 0
    %v420 = vsel %vm252, %v381, 0
    %v423 = vsel %vm252, %v382, 0
    %v426 = vsel %vm252, %v383, 0
    %428 = vmatprep.subr.bf16.mxu0 0
    %429 = vmatpush1.bf16.msra.mxu0 %v403
    %430 = vmatprep.subr.bf16.mxu0 0
    %431 = vmatpush1.bf16.msra.mxu0 %v404
    %432 = vmatprep.subr.bf16.mxu0 0
    %433 = vmatpush1.bf16.msra.mxu0 0
    %434 = vmatprep.subr.bf16.mxu0 0
    %435 = vmatpush1.bf16.msra.mxu0 0
    %436 = vmatprep.subr.bf16.mxu0 0
    %437 = vmatpush1.bf16.msra.mxu0 0
    %438 = vmatprep.subr.bf16.mxu0 0
    %439 = vmatpush1.bf16.msra.mxu0 0
    %440 = vmatprep.subr.bf16.mxu0 0
    %441 = vmatpush1.bf16.msra.mxu0 0
    %442 = vmatprep.subr.bf16.mxu0 0
    %443 = vmatpush1.bf16.msra.mxu0 0
    %444 = vmatprep.subr.bf16.mxu0 0
    %445 = vmatpush1.bf16.msra.mxu0 0
    %446 = vmatprep.subr.bf16.mxu0 0
    %447 = vmatpush1.bf16.msra.mxu0 0
    %448 = vmatprep.subr.bf16.mxu0 0
    %449 = vmatpush1.bf16.msra.mxu0 0
    %450 = vmatprep.subr.bf16.mxu0 0
    %451 = vmatpush1.bf16.msra.mxu0 0
    %452 = vmatprep.subr.bf16.mxu0 0
    %453 = vmatpush1.bf16.msra.mxu0 0
    %454 = vmatprep.subr.bf16.mxu0 0
    %455 = vmatpush1.bf16.msra.mxu0 0
    %456 = vmatprep.subr.bf16.mxu0 0
    %457 = vmatpush1.bf16.msra.mxu0 0
    %458 = vmatprep.subr.bf16.mxu0 0
    %459 = vmatpush1.bf16.msra.mxu0 0
    %460 = vmatprep.mubr.bf16.mxu0 0
    %461 = vmatmul.mubr.bf16.gmra.mrb[0].mxu0 %v408
    %v462 = vpop.f32.mrb[0].mxu0
    %v463 = vadd.f32 %v393, %v462
    %v464 = vpop.f32.mrb[0].mxu0
    %v465 = vpop.f32.mrb[0].mxu0
    %v466 = vadd.f32 %v393, %v465
    %v467 = vpop.f32.mrb[0].mxu0
    %468 = vmatprep.mubr.bf16.mxu0 0
    %469 = vmatmul.mubr.bf16.gmra.mrb[0].mxu0 %v411
    %v470 = vpop.f32.mrb[0].mxu0
    %v471 = vadd.f32 %v393, %v470
    %v472 = vpop.f32.mrb[0].mxu0
    %v473 = vpop.f32.mrb[0].mxu0
    %v474 = vadd.f32 %v393, %v473
    %v475 = vpop.f32.mrb[0].mxu0
    %476 = vmatprep.mubr.bf16.mxu0 0
    %477 = vmatmul.mubr.bf16.gmra.mrb[0].mxu0 %v414
    %v478 = vpop.f32.mrb[0].mxu0
    %v479 = vadd.f32 %v393, %v478
    %v480 = vpop.f32.mrb[0].mxu0
    %v481 = vpop.f32.mrb[0].mxu0
    %v482 = vadd.f32 %v393, %v481
    %v483 = vpop.f32.mrb[0].mxu0
    %484 = vmatprep.mubr.bf16.mxu0 0
    %485 = vmatmul.mubr.bf16.gmra.mrb[0].mxu0 %v417
    %v486 = vpop.f32.mrb[0].mxu0
    %v487 = vadd.f32 %v393, %v486
    %v488 = vpop.f32.mrb[0].mxu0
    %v489 = vpop.f32.mrb[0].mxu0
    %v490 = vadd.f32 %v393, %v489
    %v491 = vpop.f32.mrb[0].mxu0
    %492 = vmatprep.mubr.bf16.mxu0 0
    %493 = vmatmul.mubr.bf16.gmra.mrb[0].mxu0 %v420
    %v494 = vpop.f32.mrb[0].mxu0
    %v495 = vadd.f32 %v393, %v494
    %v496 = vpop.f32.mrb[0].mxu0
    %v497 = vpop.f32.mrb[0].mxu0
    %v498 = vadd.f32 %v393, %v497
    %v499 = vpop.f32.mrb[0].mxu0
    %500 = vmatprep.mubr.bf16.mxu0 0
    %501 = vmatmul.mubr.bf16.gmra.mrb[0].mxu0 %v423
    %v502 = vpop.f32.mrb[0].mxu0
    %v503 = vadd.f32 %v393, %v502
    %v504 = vpop.f32.mrb[0].mxu0
    %v505 = vpop.f32.mrb[0].mxu0
    %v506 = vadd.f32 %v393, %v505
    %v507 = vpop.f32.mrb[0].mxu0
    %508 = vmatprep.mubr.bf16.mxu0 0
    %509 = vmatmul.mubr.bf16.gmra.mrb[0].mxu0 %v426
    %v510 = vpop.f32.mrb[0].mxu0
    %v511 = vadd.f32 %v393, %v510
    %v512 = vpop.f32.mrb[0].mxu0
    %v513 = vpop.f32.mrb[0].mxu0
    %v514 = vadd.f32 %v393, %v513
    %v515 = vpop.f32.mrb[0].mxu0
    %516 = vdwg.mxu0
    %v517 = vmax.f32 %v463, 0.0
    %v518 = vmax.f32 %v466, 0.0
    %v519 = vmax.f32 %v471, 0.0
    %v520 = vmax.f32 %v474, 0.0
    %v521 = vmax.f32 %v479, 0.0
    %v522 = vmax.f32 %v482, 0.0
    %v523 = vmax.f32 %v487, 0.0
    %v524 = vmax.f32 %v490, 0.0
    %v525 = vmax.f32 %v495, 0.0
    %v526 = vmax.f32 %v498, 0.0
    %v527 = vmax.f32 %v503, 0.0
    %v528 = vmax.f32 %v506, 0.0
    %v529 = vmax.f32 %v511, 0.0
    %v530 = vmax.f32 %v514, 0.0
    %v531 = vpack.c.bf16 %v518, %v517
    %v532 = vpack.c.bf16 %v520, %v519
    %v533 = vpack.c.bf16 %v522, %v521
    %v534 = vpack.c.bf16 %v524, %v523
    %v535 = vpack.c.bf16 %v526, %v525
    %v536 = vpack.c.bf16 %v528, %v527
    %v537 = vpack.c.bf16 %v530, %v529
    %v538 = vld [vmem:[%s7] sm:$0xf]
    %v539 = vld [vmem:[%s7 + $0x4] sm:$0xf]
    %v540 = vld [vmem:[%s7 + $0x8] sm:$0xf]
    %v541 = vld [vmem:[%s7 + $0xc] sm:$0xf]
    %v542 = vld [vmem:[%s8] sm:$0x1]
    %v544 = vlaneseq
    %v545 = vshrl.u32 %v544, 7
    %v546 = vsub.s32 0, %v545
    %v547 = vrot.slane %v542, %v546
    %v553 = vunpack.c.l.b16 %v538
    %v554 = vunpack.c.l.b16 %v539
    %v555 = vunpack.c.l.b16 %v540
    %v556 = vunpack.c.l.b16 %v541
    %v557 = vpack.c.b16 %v554, %v553
    %v558 = vpack.c.b16 %v556, %v555
    %v562 = vsel %vm252, %v531, 0
    %v565 = vsel %vm252, %v532, 0
    %v568 = vsel %vm252, %v533, 0
    %v571 = vsel %vm252, %v534, 0
    %v574 = vsel %vm252, %v535, 0
    %v577 = vsel %vm252, %v536, 0
    %v580 = vsel %vm252, %v537, 0
    %582 = vmatprep.subr.bf16.mxu0 0
    %583 = vmatpush1.bf16.msra.mxu0 %v557
    %584 = vmatprep.subr.bf16.mxu0 0
    %585 = vmatpush1.bf16.msra.mxu0 %v558
    %586 = vmatprep.subr.bf16.mxu0 0
    %587 = vmatpush1.bf16.msra.mxu0 0
    %588 = vmatprep.subr.bf16.mxu0 0
    %589 = vmatpush1.bf16.msra.mxu0 0
    %590 = vmatprep.subr.bf16.mxu0 0
    %591 = vmatpush1.bf16.msra.mxu0 0
    %592 = vmatprep.subr.bf16.mxu0 0
    %593 = vmatpush1.bf16.msra.mxu0 0
    %594 = vmatprep.subr.bf16.mxu0 0
    %595 = vmatpush1.bf16.msra.mxu0 0
    %596 = vmatprep.subr.bf16.mxu0 0
    %597 = vmatpush1.bf16.msra.mxu0 0
    %598 = vmatprep.subr.bf16.mxu0 0
    %599 = vmatpush1.bf16.msra.mxu0 0
    %600 = vmatprep.subr.bf16.mxu0 0
    %601 = vmatpush1.bf16.msra.mxu0 0
    %602 = vmatprep.subr.bf16.mxu0 0
    %603 = vmatpush1.bf16.msra.mxu0 0
    %604 = vmatprep.subr.bf16.mxu0 0
    %605 = vmatpush1.bf16.msra.mxu0 0
    %606 = vmatprep.subr.bf16.mxu0 0
    %607 = vmatpush1.bf16.msra.mxu0 0
    %608 = vmatprep.subr.bf16.mxu0 0
    %609 = vmatpush1.bf16.msra.mxu0 0
    %610 = vmatprep.subr.bf16.mxu0 0
    %611 = vmatpush1.bf16.msra.mxu0 0
    %612 = vmatprep.subr.bf16.mxu0 0
    %613 = vmatpush1.bf16.msra.mxu0 0
    %614 = vmatprep.mubr.bf16.mxu0 0
    %615 = vmatmul.mubr.bf16.gmra.mrb[0].mxu0 %v562
    %v616 = vpop.f32.mrb[0].mxu0
    %v617 = vadd.f32 %v547, %v616
    %v618 = vpop.f32.mrb[0].mxu0
    %v619 = vpop.f32.mrb[0].mxu0
    %v620 = vadd.f32 %v547, %v619
    %v621 = vpop.f32.mrb[0].mxu0
    %622 = vmatprep.mubr.bf16.mxu0 0
    %623 = vmatmul.mubr.bf16.gmra.mrb[0].mxu0 %v565
    %v624 = vpop.f32.mrb[0].mxu0
    %v625 = vadd.f32 %v547, %v624
    %v626 = vpop.f32.mrb[0].mxu0
    %v627 = vpop.f32.mrb[0].mxu0
    %v628 = vadd.f32 %v547, %v627
    %v629 = vpop.f32.mrb[0].mxu0
    %630 = vmatprep.mubr.bf16.mxu0 0
    %631 = vmatmul.mubr.bf16.gmra.mrb[0].mxu0 %v568
    %v632 = vpop.f32.mrb[0].mxu0
    %v633 = vadd.f32 %v547, %v632
    %v634 = vpop.f32.mrb[0].mxu0
    %v635 = vpop.f32.mrb[0].mxu0
    %v636 = vadd.f32 %v547, %v635
    %v637 = vpop.f32.mrb[0].mxu0
    %638 = vmatprep.mubr.bf16.mxu0 0
    %639 = vmatmul.mubr.bf16.gmra.mrb[0].mxu0 %v571
    %v640 = vpop.f32.mrb[0].mxu0
    %v641 = vadd.f32 %v547, %v640
    %v642 = vpop.f32.mrb[0].mxu0
    %v643 = vpop.f32.mrb[0].mxu0
    %v644 = vadd.f32 %v547, %v643
    %v645 = vpop.f32.mrb[0].mxu0
    %646 = vmatprep.mubr.bf16.mxu0 0
    %647 = vmatmul.mubr.bf16.gmra.mrb[0].mxu0 %v574
    %v648 = vpop.f32.mrb[0].mxu0
    %v649 = vadd.f32 %v547, %v648
    %v650 = vpop.f32.mrb[0].mxu0
    %v651 = vpop.f32.mrb[0].mxu0
    %v652 = vadd.f32 %v547, %v651
    %v653 = vpop.f32.mrb[0].mxu0
    %654 = vmatprep.mubr.bf16.mxu0 0
    %655 = vmatmul.mubr.bf16.gmra.mrb[0].mxu0 %v577
    %v656 = vpop.f32.mrb[0].mxu0
    %v657 = vadd.f32 %v547, %v656
    %v658 = vpop.f32.mrb[0].mxu0
    %v659 = vpop.f32.mrb[0].mxu0
    %v660 = vadd.f32 %v547, %v659
    %v661 = vpop.f32.mrb[0].mxu0
    %662 = vmatprep.mubr.bf16.mxu0 0
    %663 = vmatmul.mubr.bf16.gmra.mrb[0].mxu0 %v580
    %v664 = vpop.f32.mrb[0].mxu0
    %v665 = vadd.f32 %v547, %v664
    %v666 = vpop.f32.mrb[0].mxu0
    %v667 = vpop.f32.mrb[0].mxu0
    %v668 = vadd.f32 %v547, %v667
    %v669 = vpop.f32.mrb[0].mxu0
    %670 = vdwg.mxu0
    %vm671 = vcmask 64512
    %672 = vst.msk [vmem:[#allocation2] sm:$0xff] %vm671, %v617
    %673 = vst.msk [vmem:[#allocation2 + $0x8] sm:$0xff] %vm671, %v620
    %674 = vst.msk [vmem:[#allocation2 + $0x10] sm:$0xff] %vm671, %v625
    %675 = vst.msk [vmem:[#allocation2 + $0x18] sm:$0xff] %vm671, %v628
    %676 = vst.msk [vmem:[#allocation2 + $0x20] sm:$0xff] %vm671, %v633
    %677 = vst.msk [vmem:[#allocation2 + $0x28] sm:$0xff] %vm671, %v636
    %678 = vst.msk [vmem:[#allocation2 + $0x30] sm:$0xff] %vm671, %v641
    %679 = vst.msk [vmem:[#allocation2 + $0x38] sm:$0xff] %vm671, %v644
    %680 = vst.msk [vmem:[#allocation2 + $0x40] sm:$0xff] %vm671, %v649
    %681 = vst.msk [vmem:[#allocation2 + $0x48] sm:$0xff] %vm671, %v652
    %682 = vst.msk [vmem:[#allocation2 + $0x50] sm:$0xff] %vm671, %v657
    %683 = vst.msk [vmem:[#allocation2 + $0x58] sm:$0xff] %vm671, %v660
    %684 = vst.msk [vmem:[#allocation2 + $0x60] sm:$0xff] %vm671, %v665
    %685 = vst.msk [vmem:[#allocation2 + $0x68] sm:$0xff] %vm671, %v668
    // Predicated region
    $region38: #{tpu_custom_call.1} parent=1 // pred_check
      _
    $region39: #{tpu_custom_call.1} parent=1 // pred_check_branch
      %687 = sbr.rel (0) target = $region41
    $region40: #{tpu_custom_call.1} parent=1 // pred_region
      // Predicated region
      $region42: #{tpu_custom_call.1} parent=40 // pred_check
        _
      $region43: #{tpu_custom_call.1} parent=40 // pred_check_branch
        %689 = sbr.rel (0) target = $region45
      $region44: #{tpu_custom_call.1} parent=40 // pred_region
        // Predicated region
        $region46: #{tpu_custom_call.1} parent=44 // pred_check
          _
        $region47: #{tpu_custom_call.1} parent=44 // pred_check_branch
          %691 = sbr.rel (0) target = $region49
        $region48: #{tpu_custom_call.1} parent=44 // pred_region
          // Predicated region
          $region61: #{tpu_custom_call.1} parent=48 // pred_check
            _
          $region62: #{tpu_custom_call.1} parent=48 // pred_check_branch
            %730 = sbr.rel (0) target = $region64
          $region63: #{tpu_custom_call.1} parent=48 // pred_region
            loop: start=0, step=1, limit=1
            $region65: #{tpu_custom_call.1} parent=63 // loop_pre_header
              _
            $region66: #{tpu_custom_call.1} parent=63 // loop_header
              %s732 = sphi 0, %s736
              %p733 = scmp.ge.s32.totalorder %s732, 1
              %s737 = sphi [#allocation2], [#allocation2]
              %s738 = sphi %s9, %s9
            $region67: #{tpu_custom_call.1} parent=63 // loop_header_branch
              %735 = sbr.rel (%p733) target = $region71
            $region68: #{tpu_custom_call.1} parent=63 // loop_body
              %v739 = vld [vmem:[%s737] sm:$0xff]
              %740 = vst [vmem:[%s738] sm:$0xff] %v739
              %v741 = vld [vmem:[%s737 + $0x8] sm:$0xff]
              %742 = vst [vmem:[%s738 + $0x8] sm:$0xff] %v741
              %v743 = vld [vmem:[%s737 + $0x10] sm:$0xff]
              %744 = vst [vmem:[%s738 + $0x10] sm:$0xff] %v743
              %v745 = vld [vmem:[%s737 + $0x18] sm:$0xff]
              %746 = vst [vmem:[%s738 + $0x18] sm:$0xff] %v745
              %v747 = vld [vmem:[%s737 + $0x20] sm:$0xff]
              %748 = vst [vmem:[%s738 + $0x20] sm:$0xff] %v747
              %v749 = vld [vmem:[%s737 + $0x28] sm:$0xff]
              %750 = vst [vmem:[%s738 + $0x28] sm:$0xff] %v749
              %v751 = vld [vmem:[%s737 + $0x30] sm:$0xff]
              %752 = vst [vmem:[%s738 + $0x30] sm:$0xff] %v751
              %v753 = vld [vmem:[%s737 + $0x38] sm:$0xff]
              %754 = vst [vmem:[%s738 + $0x38] sm:$0xff] %v753
              %v755 = vld [vmem:[%s737 + $0x40] sm:$0xff]
              %756 = vst [vmem:[%s738 + $0x40] sm:$0xff] %v755
              %v757 = vld [vmem:[%s737 + $0x48] sm:$0xff]
              %758 = vst [vmem:[%s738 + $0x48] sm:$0xff] %v757
              %v759 = vld [vmem:[%s737 + $0x50] sm:$0xff]
              %760 = vst [vmem:[%s738 + $0x50] sm:$0xff] %v759
              %v761 = vld [vmem:[%s737 + $0x58] sm:$0xff]
              %762 = vst [vmem:[%s738 + $0x58] sm:$0xff] %v761
              %v763 = vld [vmem:[%s737 + $0x60] sm:$0xff]
              %764 = vst [vmem:[%s738 + $0x60] sm:$0xff] %v763
            $region69: #{tpu_custom_call.1} parent=63 // loop_footer
              %s736 = sadd.s32 1, %s732
            $region70: #{tpu_custom_call.1} parent=63 // loop_footer_branch
              %731 = sbr.rel target = $region66
            $region71: #{tpu_custom_call.1} parent=63 // loop_exit
              _
          $region64: #{tpu_custom_call.1} parent=48 // pred_fallthru
            _
          // Predicated region
          $region72: #{tpu_custom_call.1} parent=48 // pred_check
            _
          $region73: #{tpu_custom_call.1} parent=48 // pred_check_branch
            %766 = sbr.rel target = $region75
          $region74: #{tpu_custom_call.1} parent=48 // pred_region
            _
          $region75: #{tpu_custom_call.1} parent=48 // pred_fallthru
            _
        $region49: #{tpu_custom_call.1} parent=44 // pred_fallthru
          _
        // Predicated region
        $region50: #{tpu_custom_call.1} parent=44 // pred_check
          _
        $region51: #{tpu_custom_call.1} parent=44 // pred_check_branch
          %693 = sbr.rel target = $region53
        $region52: #{tpu_custom_call.1} parent=44 // pred_region
          loop: start=0, step=1, limit=1
          $region54: #{tpu_custom_call.1} parent=52 // loop_pre_header
            _
          $region55: #{tpu_custom_call.1} parent=52 // loop_header
            %s696 = sphi 0, %s700
            %p697 = scmp.ge.s32.totalorder %s696, 1
            %s701 = sphi [#allocation2], [#allocation2]
            %s702 = sphi %s9, %s9
          $region56: #{tpu_custom_call.1} parent=52 // loop_header_branch
            %699 = sbr.rel (%p697) target = $region60
          $region57: #{tpu_custom_call.1} parent=52 // loop_body
            %v703 = vld [vmem:[%s701] sm:$0xff]
            %704 = vst [vmem:[%s702] sm:$0xff] %v703
            %v705 = vld [vmem:[%s701 + $0x8] sm:$0xff]
            %706 = vst [vmem:[%s702 + $0x8] sm:$0xff] %v705
            %v707 = vld [vmem:[%s701 + $0x10] sm:$0xff]
            %708 = vst [vmem:[%s702 + $0x10] sm:$0xff] %v707
            %v709 = vld [vmem:[%s701 + $0x18] sm:$0xff]
            %710 = vst [vmem:[%s702 + $0x18] sm:$0xff] %v709
            %v711 = vld [vmem:[%s701 + $0x20] sm:$0xff]
            %712 = vst [vmem:[%s702 + $0x20] sm:$0xff] %v711
            %v713 = vld [vmem:[%s701 + $0x28] sm:$0xff]
            %714 = vst [vmem:[%s702 + $0x28] sm:$0xff] %v713
            %v715 = vld [vmem:[%s701 + $0x30] sm:$0xff]
            %716 = vst [vmem:[%s702 + $0x30] sm:$0xff] %v715
            %v717 = vld [vmem:[%s701 + $0x38] sm:$0xff]
            %718 = vst [vmem:[%s702 + $0x38] sm:$0xff] %v717
            %v719 = vld [vmem:[%s701 + $0x40] sm:$0xff]
            %720 = vst [vmem:[%s702 + $0x40] sm:$0xff] %v719
            %v721 = vld [vmem:[%s701 + $0x48] sm:$0xff]
            %722 = vst [vmem:[%s702 + $0x48] sm:$0xff] %v721
            %v723 = vld [vmem:[%s701 + $0x50] sm:$0xff]
            %724 = vst [vmem:[%s702 + $0x50] sm:$0xff] %v723
            %v725 = vld [vmem:[%s701 + $0x58] sm:$0xff]
            %726 = vst [vmem:[%s702 + $0x58] sm:$0xff] %v725
            %v727 = vld [vmem:[%s701 + $0x60] sm:$0xff]
            %728 = vst [vmem:[%s702 + $0x60] sm:$0xff] %v727
          $region58: #{tpu_custom_call.1} parent=52 // loop_footer
            %s700 = sadd.s32 1, %s696
          $region59: #{tpu_custom_call.1} parent=52 // loop_footer_branch
            %695 = sbr.rel target = $region55
          $region60: #{tpu_custom_call.1} parent=52 // loop_exit
            _
        $region53: #{tpu_custom_call.1} parent=44 // pred_fallthru
          _
      $region45: #{tpu_custom_call.1} parent=40 // pred_fallthru
        _
      %767 = vnop
    $region41: #{tpu_custom_call.1} parent=1 // pred_fallthru
      _
    // Predicated region
    $region76: #{tpu_custom_call.1} parent=1 // pred_check
      _
    $region77: #{tpu_custom_call.1} parent=1 // pred_check_branch
      %769 = sbr.rel (0) target = $region79
    $region78: #{tpu_custom_call.1} parent=1 // pred_region
      _
    $region79: #{tpu_custom_call.1} parent=1 // pred_fallthru
      _

// kernel: tpu_custom_call.1
$region0: #{tpu_custom_call.1}
  #allocation0 [shape = 'u32[]', space=smem, size = 0x4, offset = 0x4, fixed_abs, tag = 'smem constant byte address 0x4 - core index']
  #allocation1 [shape = 'u32[144,128]{1,0:T(1,128)}', space=vmem, size = 0x12000, scoped, tag = 'internal scratch']
  %s0 = inlined_call_operand.vmem [shape: bf16[100,16], index: 0, kind: input, shape index: {}]
  %s1 = inlined_call_operand.vmem [shape: bf16[16,32], index: 1, kind: input, shape index: {}]
  %s2 = inlined_call_operand.vmem [shape: f32[1,32], index: 2, kind: input, shape index: {}]
  %s3 = inlined_call_operand.vmem [shape: bf16[32,32], index: 3, kind: input, shape index: {}]
  %s4 = inlined_call_operand.vmem [shape: f32[1,32], index: 4, kind: input, shape index: {}]
  %s5 = inlined_call_operand.vmem [shape: bf16[32,32], index: 5, kind: input, shape index: {}]
  %s6 = inlined_call_operand.vmem [shape: f32[1,32], index: 6, kind: input, shape index: {}]
  %s7 = inlined_call_operand.vmem [shape: bf16[32,8], index: 7, kind: input, shape index: {}]
  %s8 = inlined_call_operand.vmem [shape: f32[1,8], index: 8, kind: input, shape index: {}]
  %s9 = inlined_call_operand.vmem [shape: f32[100,8], index: 9, kind: output, shape index: {}]
  %s10 = sld [smem:[#allocation0]]
  $region80: #{tpu_custom_call.1} parent=0
    _
  %s12 = ssub.s32 1, %s10
  %s13 = scalar_select 0, %s12, %s10
  $region1: #{tpu_custom_call.1} parent=0
    #allocation2 [shape = 'u8[57344]{0}', space=vmem, size = 0xe000, scoped, tag = 'output window, operand 0, single buffered']
    // Predicated region
    $region2: #{tpu_custom_call.1} parent=1 // pred_check
      _
    $region3: #{tpu_custom_call.1} parent=1 // pred_check_branch
      %15 = sbr.rel (0) target = $region5
    $region4: #{tpu_custom_call.1} parent=1 // pred_region
      _
    $region5: #{tpu_custom_call.1} parent=1 // pred_fallthru
      _
    // Predicated region
    $region6: #{tpu_custom_call.1} parent=1 // pred_check
      _
    $region7: #{tpu_custom_call.1} parent=1 // pred_check_branch
      %17 = sbr.rel (0) target = $region9
    $region8: #{tpu_custom_call.1} parent=1 // pred_region
      _
    $region9: #{tpu_custom_call.1} parent=1 // pred_fallthru
      _
    // Predicated region
    $region10: #{tpu_custom_call.1} parent=1 // pred_check
      _
    $region11: #{tpu_custom_call.1} parent=1 // pred_check_branch
      %19 = sbr.rel (0) target = $region13
    $region12: #{tpu_custom_call.1} parent=1 // pred_region
      _
    $region13: #{tpu_custom_call.1} parent=1 // pred_fallthru
      _
    // Predicated region
    $region14: #{tpu_custom_call.1} parent=1 // pred_check
      _
    $region15: #{tpu_custom_call.1} parent=1 // pred_check_branch
      %21 = sbr.rel (0) target = $region17
    $region16: #{tpu_custom_call.1} parent=1 // pred_region
      _
    $region17: #{tpu_custom_call.1} parent=1 // pred_fallthru
      _
    // Predicated region
    $region18: #{tpu_custom_call.1} parent=1 // pred_check
      _
    $region19: #{tpu_custom_call.1} parent=1 // pred_check_branch
      %23 = sbr.rel (0) target = $region21
    $region20: #{tpu_custom_call.1} parent=1 // pred_region
      _
    $region21: #{tpu_custom_call.1} parent=1 // pred_fallthru
      _
    // Predicated region
    $region22: #{tpu_custom_call.1} parent=1 // pred_check
      _
    $region23: #{tpu_custom_call.1} parent=1 // pred_check_branch
      %25 = sbr.rel (0) target = $region25
    $region24: #{tpu_custom_call.1} parent=1 // pred_region
      _
    $region25: #{tpu_custom_call.1} parent=1 // pred_fallthru
      _
    // Predicated region
    $region26: #{tpu_custom_call.1} parent=1 // pred_check
      _
    $region27: #{tpu_custom_call.1} parent=1 // pred_check_branch
      %27 = sbr.rel (0) target = $region29
    $region28: #{tpu_custom_call.1} parent=1 // pred_region
      _
    $region29: #{tpu_custom_call.1} parent=1 // pred_fallthru
      _
    // Predicated region
    $region30: #{tpu_custom_call.1} parent=1 // pred_check
      _
    $region31: #{tpu_custom_call.1} parent=1 // pred_check_branch
      %29 = sbr.rel (0) target = $region33
    $region32: #{tpu_custom_call.1} parent=1 // pred_region
      _
    $region33: #{tpu_custom_call.1} parent=1 // pred_fallthru
      _
    // Predicated region
    $region34: #{tpu_custom_call.1} parent=1 // pred_check
      _
    $region35: #{tpu_custom_call.1} parent=1 // pred_check_branch
      %31 = sbr.rel (0) target = $region37
    $region36: #{tpu_custom_call.1} parent=1 // pred_region
      _
    $region37: #{tpu_custom_call.1} parent=1 // pred_fallthru
      _
    %v33 = vld [vmem:[%s0] sm:$0xf]
    %v34 = vld [vmem:[%s0 + $0x4] sm:$0xf]
    %v35 = vld [vmem:[%s0 + $0x8] sm:$0xf]
    %v36 = vld [vmem:[%s0 + $0xc] sm:$0xf]
    %v37 = vld [vmem:[%s0 + $0x10] sm:$0xf]
    %v38 = vld [vmem:[%s0 + $0x14] sm:$0xf]
    %v39 = vld [vmem:[%s0 + $0x18] sm:$0xf]
    %v40 = vld [vmem:[%s0 + $0x1c] sm:$0xf]
    %v41 = vld [vmem:[%s0 + $0x20] sm:$0xf]
    %v42 = vld [vmem:[%s0 + $0x24] sm:$0xf]
    %v43 = vld [vmem:[%s0 + $0x28] sm:$0xf]
    %v44 = vld [vmem:[%s0 + $0x2c] sm:$0xf]
    %v45 = vld [vmem:[%s0 + $0x30] sm:$0xf]
    %v46 = vld [vmem:[%s0 + $0x34] sm:$0xf]
    %v47 = vld [vmem:[%s1] sm:$0xf]
    %v48 = vld [vmem:[%s1 + $0x4] sm:$0xf]
    %v49 = vld [vmem:[%s2] sm:$0x1]
    %v51 = vlaneseq
    %v52 = vshrl.u32 %v51, 7
    %v53 = vsub.s32 0, %v52
    %v54 = vrot.slane %v49, %v53
    %v70 = vunpack.c.l.b16 %v33
    %v71 = vunpack.c.l.b16 %v34
    %v72 = vunpack.c.l.b16 %v35
    %v73 = vunpack.c.l.b16 %v36
    %v74 = vunpack.c.l.b16 %v37
    %v75 = vunpack.c.l.b16 %v38
    %v76 = vunpack.c.l.b16 %v39
    %v77 = vunpack.c.l.b16 %v40
    %v78 = vunpack.c.l.b16 %v41
    %v79 = vunpack.c.l.b16 %v42
    %v80 = vunpack.c.l.b16 %v43
    %v81 = vunpack.c.l.b16 %v44
    %v82 = vunpack.c.l.b16 %v45
    %v83 = vunpack.c.l.b16 %v46
    %v84 = vpack.c.b16 %v71, %v70
    %v85 = vpack.c.b16 %v73, %v72
    %v86 = vpack.c.b16 %v75, %v74
    %v87 = vpack.c.b16 %v77, %v76
    %v88 = vpack.c.b16 %v79, %v78
    %v89 = vpack.c.b16 %v81, %v80
    %v90 = vpack.c.b16 %v83, %v82
    %v93 = vunpack.c.l.b16 %v47
    %v94 = vunpack.c.l.b16 %v48
    %v95 = vpack.c.b16 %v94, %v93
    %vm97 = vcmask 130048
    %v99 = vsel %vm97, %v84, 0
    %v102 = vsel %vm97, %v85, 0
    %v105 = vsel %vm97, %v86, 0
    %v108 = vsel %vm97, %v87, 0
    %v111 = vsel %vm97, %v88, 0
    %v114 = vsel %vm97, %v89, 0
    %v117 = vsel %vm97, %v90, 0
    %119 = vmatprep.subr.bf16.mxu0 0
    %120 = vmatpush1.bf16.msra.mxu0 %v95
    %121 = vmatprep.subr.bf16.mxu0 0
    %122 = vmatpush1.bf16.msra.mxu0 0
    %123 = vmatprep.subr.bf16.mxu0 0
    %124 = vmatpush1.bf16.msra.mxu0 0
    %125 = vmatprep.subr.bf16.mxu0 0
    %126 = vmatpush1.bf16.msra.mxu0 0
    %127 = vmatprep.subr.bf16.mxu0 0
    %128 = vmatpush1.bf16.msra.mxu0 0
    %129 = vmatprep.subr.bf16.mxu0 0
    %130 = vmatpush1.bf16.msra.mxu0 0
    %131 = vmatprep.subr.bf16.mxu0 0
    %132 = vmatpush1.bf16.msra.mxu0 0
    %133 = vmatprep.subr.bf16.mxu0 0
    %134 = vmatpush1.bf16.msra.mxu0 0
    %135 = vmatprep.subr.bf16.mxu0 0
    %136 = vmatpush1.bf16.msra.mxu0 0
    %137 = vmatprep.subr.bf16.mxu0 0
    %138 = vmatpush1.bf16.msra.mxu0 0
    %139 = vmatprep.subr.bf16.mxu0 0
    %140 = vmatpush1.bf16.msra.mxu0 0
    %141 = vmatprep.subr.bf16.mxu0 0
    %142 = vmatpush1.bf16.msra.mxu0 0
    %143 = vmatprep.subr.bf16.mxu0 0
    %144 = vmatpush1.bf16.msra.mxu0 0
    %145 = vmatprep.subr.bf16.mxu0 0
    %146 = vmatpush1.bf16.msra.mxu0 0
    %147 = vmatprep.subr.bf16.mxu0 0
    %148 = vmatpush1.bf16.msra.mxu0 0
    %149 = vmatprep.subr.bf16.mxu0 0
    %150 = vmatpush1.bf16.msra.mxu0 0
    %151 = vmatprep.mubr.bf16.mxu0 0
    %152 = vmatmul.mubr.bf16.gmra.mrb[0].mxu0 %v99
    %v153 = vpop.f32.mrb[0].mxu0
    %v154 = vadd.f32 %v54, %v153
    %v155 = vpop.f32.mrb[0].mxu0
    %v156 = vpop.f32.mrb[0].mxu0
    %v157 = vadd.f32 %v54, %v156
    %v158 = vpop.f32.mrb[0].mxu0
    %159 = vmatprep.mubr.bf16.mxu0 0
    %160 = vmatmul.mubr.bf16.gmra.mrb[0].mxu0 %v102
    %v161 = vpop.f32.mrb[0].mxu0
    %v162 = vadd.f32 %v54, %v161
    %v163 = vpop.f32.mrb[0].mxu0
    %v164 = vpop.f32.mrb[0].mxu0
    %v165 = vadd.f32 %v54, %v164
    %v166 = vpop.f32.mrb[0].mxu0
    %167 = vmatprep.mubr.bf16.mxu0 0
    %168 = vmatmul.mubr.bf16.gmra.mrb[0].mxu0 %v105
    %v169 = vpop.f32.mrb[0].mxu0
    %v170 = vadd.f32 %v54, %v169
    %v171 = vpop.f32.mrb[0].mxu0
    %v172 = vpop.f32.mrb[0].mxu0
    %v173 = vadd.f32 %v54, %v172
    %v174 = vpop.f32.mrb[0].mxu0
    %175 = vmatprep.mubr.bf16.mxu0 0
    %176 = vmatmul.mubr.bf16.gmra.mrb[0].mxu0 %v108
    %v177 = vpop.f32.mrb[0].mxu0
    %v178 = vadd.f32 %v54, %v177
    %v179 = vpop.f32.mrb[0].mxu0
    %v180 = vpop.f32.mrb[0].mxu0
    %v181 = vadd.f32 %v54, %v180
    %v182 = vpop.f32.mrb[0].mxu0
    %183 = vmatprep.mubr.bf16.mxu0 0
    %184 = vmatmul.mubr.bf16.gmra.mrb[0].mxu0 %v111
    %v185 = vpop.f32.mrb[0].mxu0
    %v186 = vadd.f32 %v54, %v185
    %v187 = vpop.f32.mrb[0].mxu0
    %v188 = vpop.f32.mrb[0].mxu0
    %v189 = vadd.f32 %v54, %v188
    %v190 = vpop.f32.mrb[0].mxu0
    %191 = vmatprep.mubr.bf16.mxu0 0
    %192 = vmatmul.mubr.bf16.gmra.mrb[0].mxu0 %v114
    %v193 = vpop.f32.mrb[0].mxu0
    %v194 = vadd.f32 %v54, %v193
    %v195 = vpop.f32.mrb[0].mxu0
    %v196 = vpop.f32.mrb[0].mxu0
    %v197 = vadd.f32 %v54, %v196
    %v198 = vpop.f32.mrb[0].mxu0
    %199 = vmatprep.mubr.bf16.mxu0 0
    %200 = vmatmul.mubr.bf16.gmra.mrb[0].mxu0 %v117
    %v201 = vpop.f32.mrb[0].mxu0
    %v202 = vadd.f32 %v54, %v201
    %v203 = vpop.f32.mrb[0].mxu0
    %v204 = vpop.f32.mrb[0].mxu0
    %v205 = vadd.f32 %v54, %v204
    %v206 = vpop.f32.mrb[0].mxu0
    %207 = vdwg.mxu0
    %v208 = vmax.f32 %v154, 0.0
    %v209 = vmax.f32 %v157, 0.0
    %v210 = vmax.f32 %v162, 0.0
    %v211 = vmax.f32 %v165, 0.0
    %v212 = vmax.f32 %v170, 0.0
    %v213 = vmax.f32 %v173, 0.0
    %v214 = vmax.f32 %v178, 0.0
    %v215 = vmax.f32 %v181, 0.0
    %v216 = vmax.f32 %v186, 0.0
    %v217 = vmax.f32 %v189, 0.0
    %v218 = vmax.f32 %v194, 0.0
    %v219 = vmax.f32 %v197, 0.0
    %v220 = vmax.f32 %v202, 0.0
    %v221 = vmax.f32 %v205, 0.0
    %v222 = vpack.c.bf16 %v209, %v208
    %v223 = vpack.c.bf16 %v211, %v210
    %v224 = vpack.c.bf16 %v213, %v212
    %v225 = vpack.c.bf16 %v215, %v214
    %v226 = vpack.c.bf16 %v217, %v216
    %v227 = vpack.c.bf16 %v219, %v218
    %v228 = vpack.c.bf16 %v221, %v220
    %v229 = vld [vmem:[%s3] sm:$0xf]
    %v230 = vld [vmem:[%s3 + $0x4] sm:$0xf]
    %v231 = vld [vmem:[%s3 + $0x8] sm:$0xf]
    %v232 = vld [vmem:[%s3 + $0xc] sm:$0xf]
    %v233 = vld [vmem:[%s4] sm:$0x1]
    %v235 = vlaneseq
    %v236 = vshrl.u32 %v235, 7
    %v237 = vsub.s32 0, %v236
    %v238 = vrot.slane %v233, %v237
    %v244 = vunpack.c.l.b16 %v229
    %v245 = vunpack.c.l.b16 %v230
    %v246 = vunpack.c.l.b16 %v231
    %v247 = vunpack.c.l.b16 %v232
    %v248 = vpack.c.b16 %v245, %v244
    %v249 = vpack.c.b16 %v247, %v246
    %vm252 = vcmask 261120
    %v254 = vsel %vm252, %v222, 0
    %v257 = vsel %vm252, %v223, 0
    %v260 = vsel %vm252, %v224, 0
    %v263 = vsel %vm252, %v225, 0
    %v266 = vsel %vm252, %v226, 0
    %v269 = vsel %vm252, %v227, 0
    %v272 = vsel %vm252, %v228, 0
    %274 = vmatprep.subr.bf16.mxu0 0
    %275 = vmatpush1.bf16.msra.mxu0 %v248
    %276 = vmatprep.subr.bf16.mxu0 0
    %277 = vmatpush1.bf16.msra.mxu0 %v249
    %278 = vmatprep.subr.bf16.mxu0 0
    %279 = vmatpush1.bf16.msra.mxu0 0
    %280 = vmatprep.subr.bf16.mxu0 0
    %281 = vmatpush1.bf16.msra.mxu0 0
    %282 = vmatprep.subr.bf16.mxu0 0
    %283 = vmatpush1.bf16.msra.mxu0 0
    %284 = vmatprep.subr.bf16.mxu0 0
    %285 = vmatpush1.bf16.msra.mxu0 0
    %286 = vmatprep.subr.bf16.mxu0 0
    %287 = vmatpush1.bf16.msra.mxu0 0
    %288 = vmatprep.subr.bf16.mxu0 0
    %289 = vmatpush1.bf16.msra.mxu0 0
    %290 = vmatprep.subr.bf16.mxu0 0
    %291 = vmatpush1.bf16.msra.mxu0 0
    %292 = vmatprep.subr.bf16.mxu0 0
    %293 = vmatpush1.bf16.msra.mxu0 0
    %294 = vmatprep.subr.bf16.mxu0 0
    %295 = vmatpush1.bf16.msra.mxu0 0
    %296 = vmatprep.subr.bf16.mxu0 0
    %297 = vmatpush1.bf16.msra.mxu0 0
    %298 = vmatprep.subr.bf16.mxu0 0
    %299 = vmatpush1.bf16.msra.mxu0 0
    %300 = vmatprep.subr.bf16.mxu0 0
    %301 = vmatpush1.bf16.msra.mxu0 0
    %302 = vmatprep.subr.bf16.mxu0 0
    %303 = vmatpush1.bf16.msra.mxu0 0
    %304 = vmatprep.subr.bf16.mxu0 0
    %305 = vmatpush1.bf16.msra.mxu0 0
    %306 = vmatprep.mubr.bf16.mxu0 0
    %307 = vmatmul.mubr.bf16.gmra.mrb[0].mxu0 %v254
    %v308 = vpop.f32.mrb[0].mxu0
    %v309 = vadd.f32 %v238, %v308
    %v310 = vpop.f32.mrb[0].mxu0
    %v311 = vpop.f32.mrb[0].mxu0
    %v312 = vadd.f32 %v238, %v311
    %v313 = vpop.f32.mrb[0].mxu0
    %314 = vmatprep.mubr.bf16.mxu0 0
    %315 = vmatmul.mubr.bf16.gmra.mrb[0].mxu0 %v257
    %v316 = vpop.f32.mrb[0].mxu0
    %v317 = vadd.f32 %v238, %v316
    %v318 = vpop.f32.mrb[0].mxu0
    %v319 = vpop.f32.mrb[0].mxu0
    %v320 = vadd.f32 %v238, %v319
    %v321 = vpop.f32.mrb[0].mxu0
    %322 = vmatprep.mubr.bf16.mxu0 0
    %323 = vmatmul.mubr.bf16.gmra.mrb[0].mxu0 %v260
    %v324 = vpop.f32.mrb[0].mxu0
    %v325 = vadd.f32 %v238, %v324
    %v326 = vpop.f32.mrb[0].mxu0
    %v327 = vpop.f32.mrb[0].mxu0
    %v328 = vadd.f32 %v238, %v327
    %v329 = vpop.f32.mrb[0].mxu0
    %330 = vmatprep.mubr.bf16.mxu0 0
    %331 = vmatmul.mubr.bf16.gmra.mrb[0].mxu0 %v263
    %v332 = vpop.f32.mrb[0].mxu0
    %v333 = vadd.f32 %v238, %v332
    %v334 = vpop.f32.mrb[0].mxu0
    %v335 = vpop.f32.mrb[0].mxu0
    %v336 = vadd.f32 %v238, %v335
    %v337 = vpop.f32.mrb[0].mxu0
    %338 = vmatprep.mubr.bf16.mxu0 0
    %339 = vmatmul.mubr.bf16.gmra.mrb[0].mxu0 %v266
    %v340 = vpop.f32.mrb[0].mxu0
    %v341 = vadd.f32 %v238, %v340
    %v342 = vpop.f32.mrb[0].mxu0
    %v343 = vpop.f32.mrb[0].mxu0
    %v344 = vadd.f32 %v238, %v343
    %v345 = vpop.f32.mrb[0].mxu0
    %346 = vmatprep.mubr.bf16.mxu0 0
    %347 = vmatmul.mubr.bf16.gmra.mrb[0].mxu0 %v269
    %v348 = vpop.f32.mrb[0].mxu0
    %v349 = vadd.f32 %v238, %v348
    %v350 = vpop.f32.mrb[0].mxu0
    %v351 = vpop.f32.mrb[0].mxu0
    %v352 = vadd.f32 %v238, %v351
    %v353 = vpop.f32.mrb[0].mxu0
    %354 = vmatprep.mubr.bf16.mxu0 0
    %355 = vmatmul.mubr.bf16.gmra.mrb[0].mxu0 %v272
    %v356 = vpop.f32.mrb[0].mxu0
    %v357 = vadd.f32 %v238, %v356
    %v358 = vpop.f32.mrb[0].mxu0
    %v359 = vpop.f32.mrb[0].mxu0
    %v360 = vadd.f32 %v238, %v359
    %v361 = vpop.f32.mrb[0].mxu0
    %362 = vdwg.mxu0
    %v363 = vmax.f32 %v309, 0.0
    %v364 = vmax.f32 %v312, 0.0
    %v365 = vmax.f32 %v317, 0.0
    %v366 = vmax.f32 %v320, 0.0
    %v367 = vmax.f32 %v325, 0.0
    %v368 = vmax.f32 %v328, 0.0
    %v369 = vmax.f32 %v333, 0.0
    %v370 = vmax.f32 %v336, 0.0
    %v371 = vmax.f32 %v341, 0.0
    %v372 = vmax.f32 %v344, 0.0
    %v373 = vmax.f32 %v349, 0.0
    %v374 = vmax.f32 %v352, 0.0
    %v375 = vmax.f32 %v357, 0.0
    %v376 = vmax.f32 %v360, 0.0
    %v377 = vpack.c.bf16 %v364, %v363
    %v378 = vpack.c.bf16 %v366, %v365
    %v379 = vpack.c.bf16 %v368, %v367
    %v380 = vpack.c.bf16 %v370, %v369
    %v381 = vpack.c.bf16 %v372, %v371
    %v382 = vpack.c.bf16 %v374, %v373
    %v383 = vpack.c.bf16 %v376, %v375
    %v384 = vld [vmem:[%s5] sm:$0xf]
    %v385 = vld [vmem:[%s5 + $0x4] sm:$0xf]
    %v386 = vld [vmem:[%s5 + $0x8] sm:$0xf]
    %v387 = vld [vmem:[%s5 + $0xc] sm:$0xf]
    %v388 = vld [vmem:[%s6] sm:$0x1]
    %v390 = vlaneseq
    %v391 = vshrl.u32 %v390, 7
    %v392 = vsub.s32 0, %v391
    %v393 = vrot.slane %v388, %v392
    %v399 = vunpack.c.l.b16 %v384
    %v400 = vunpack.c.l.b16 %v385
    %v401 = vunpack.c.l.b16 %v386
    %v402 = vunpack.c.l.b16 %v387
    %v403 = vpack.c.b16 %v400, %v399
    %v404 = vpack.c.b16 %v402, %v401
    %v408 = vsel %vm252, %v377, 0
    %v411 = vsel %vm252, %v378, 0
    %v414 = vsel %vm252, %v379, 0
    %v417 = vsel %vm252, %v380, 0
    %v420 = vsel %vm252, %v381, 0
    %v423 = vsel %vm252, %v382, 0
    %v426 = vsel %vm252, %v383, 0
    %428 = vmatprep.subr.bf16.mxu0 0
    %429 = vmatpush1.bf16.msra.mxu0 %v403
    %430 = vmatprep.subr.bf16.mxu0 0
    %431 = vmatpush1.bf16.msra.mxu0 %v404
    %432 = vmatprep.subr.bf16.mxu0 0
    %433 = vmatpush1.bf16.msra.mxu0 0
    %434 = vmatprep.subr.bf16.mxu0 0
    %435 = vmatpush1.bf16.msra.mxu0 0
    %436 = vmatprep.subr.bf16.mxu0 0
    %437 = vmatpush1.bf16.msra.mxu0 0
    %438 = vmatprep.subr.bf16.mxu0 0
    %439 = vmatpush1.bf16.msra.mxu0 0
    %440 = vmatprep.subr.bf16.mxu0 0
    %441 = vmatpush1.bf16.msra.mxu0 0
    %442 = vmatprep.subr.bf16.mxu0 0
    %443 = vmatpush1.bf16.msra.mxu0 0
    %444 = vmatprep.subr.bf16.mxu0 0
    %445 = vmatpush1.bf16.msra.mxu0 0
    %446 = vmatprep.subr.bf16.mxu0 0
    %447 = vmatpush1.bf16.msra.mxu0 0
    %448 = vmatprep.subr.bf16.mxu0 0
    %449 = vmatpush1.bf16.msra.mxu0 0
    %450 = vmatprep.subr.bf16.mxu0 0
    %451 = vmatpush1.bf16.msra.mxu0 0
    %452 = vmatprep.subr.bf16.mxu0 0
    %453 = vmatpush1.bf16.msra.mxu0 0
    %454 = vmatprep.subr.bf16.mxu0 0
    %455 = vmatpush1.bf16.msra.mxu0 0
    %456 = vmatprep.subr.bf16.mxu0 0
    %457 = vmatpush1.bf16.msra.mxu0 0
    %458 = vmatprep.subr.bf16.mxu0 0
    %459 = vmatpush1.bf16.msra.mxu0 0
    %460 = vmatprep.mubr.bf16.mxu0 0
    %461 = vmatmul.mubr.bf16.gmra.mrb[0].mxu0 %v408
    %v462 = vpop.f32.mrb[0].mxu0
    %v463 = vadd.f32 %v393, %v462
    %v464 = vpop.f32.mrb[0].mxu0
    %v465 = vpop.f32.mrb[0].mxu0
    %v466 = vadd.f32 %v393, %v465
    %v467 = vpop.f32.mrb[0].mxu0
    %468 = vmatprep.mubr.bf16.mxu0 0
    %469 = vmatmul.mubr.bf16.gmra.mrb[0].mxu0 %v411
    %v470 = vpop.f32.mrb[0].mxu0
    %v471 = vadd.f32 %v393, %v470
    %v472 = vpop.f32.mrb[0].mxu0
    %v473 = vpop.f32.mrb[0].mxu0
    %v474 = vadd.f32 %v393, %v473
    %v475 = vpop.f32.mrb[0].mxu0
    %476 = vmatprep.mubr.bf16.mxu0 0
    %477 = vmatmul.mubr.bf16.gmra.mrb[0].mxu0 %v414
    %v478 = vpop.f32.mrb[0].mxu0
    %v479 = vadd.f32 %v393, %v478
    %v480 = vpop.f32.mrb[0].mxu0
    %v481 = vpop.f32.mrb[0].mxu0
    %v482 = vadd.f32 %v393, %v481
    %v483 = vpop.f32.mrb[0].mxu0
    %484 = vmatprep.mubr.bf16.mxu0 0
    %485 = vmatmul.mubr.bf16.gmra.mrb[0].mxu0 %v417
    %v486 = vpop.f32.mrb[0].mxu0
    %v487 = vadd.f32 %v393, %v486
    %v488 = vpop.f32.mrb[0].mxu0
    %v489 = vpop.f32.mrb[0].mxu0
    %v490 = vadd.f32 %v393, %v489
    %v491 = vpop.f32.mrb[0].mxu0
    %492 = vmatprep.mubr.bf16.mxu0 0
    %493 = vmatmul.mubr.bf16.gmra.mrb[0].mxu0 %v420
    %v494 = vpop.f32.mrb[0].mxu0
    %v495 = vadd.f32 %v393, %v494
    %v496 = vpop.f32.mrb[0].mxu0
    %v497 = vpop.f32.mrb[0].mxu0
    %v498 = vadd.f32 %v393, %v497
    %v499 = vpop.f32.mrb[0].mxu0
    %500 = vmatprep.mubr.bf16.mxu0 0
    %501 = vmatmul.mubr.bf16.gmra.mrb[0].mxu0 %v423
    %v502 = vpop.f32.mrb[0].mxu0
    %v503 = vadd.f32 %v393, %v502
    %v504 = vpop.f32.mrb[0].mxu0
    %v505 = vpop.f32.mrb[0].mxu0
    %v506 = vadd.f32 %v393, %v505
    %v507 = vpop.f32.mrb[0].mxu0
    %508 = vmatprep.mubr.bf16.mxu0 0
    %509 = vmatmul.mubr.bf16.gmra.mrb[0].mxu0 %v426
    %v510 = vpop.f32.mrb[0].mxu0
    %v511 = vadd.f32 %v393, %v510
    %v512 = vpop.f32.mrb[0].mxu0
    %v513 = vpop.f32.mrb[0].mxu0
    %v514 = vadd.f32 %v393, %v513
    %v515 = vpop.f32.mrb[0].mxu0
    %516 = vdwg.mxu0
    %v517 = vmax.f32 %v463, 0.0
    %v518 = vmax.f32 %v466, 0.0
    %v519 = vmax.f32 %v471, 0.0
    %v520 = vmax.f32 %v474, 0.0
    %v521 = vmax.f32 %v479, 0.0
    %v522 = vmax.f32 %v482, 0.0
    %v523 = vmax.f32 %v487, 0.0
    %v524 = vmax.f32 %v490, 0.0
    %v525 = vmax.f32 %v495, 0.0
    %v526 = vmax.f32 %v498, 0.0
    %v527 = vmax.f32 %v503, 0.0
    %v528 = vmax.f32 %v506, 0.0
    %v529 = vmax.f32 %v511, 0.0
    %v530 = vmax.f32 %v514, 0.0
    %v531 = vpack.c.bf16 %v518, %v517
    %v532 = vpack.c.bf16 %v520, %v519
    %v533 = vpack.c.bf16 %v522, %v521
    %v534 = vpack.c.bf16 %v524, %v523
    %v535 = vpack.c.bf16 %v526, %v525
    %v536 = vpack.c.bf16 %v528, %v527
    %v537 = vpack.c.bf16 %v530, %v529
    %v538 = vld [vmem:[%s7] sm:$0xf]
    %v539 = vld [vmem:[%s7 + $0x4] sm:$0xf]
    %v540 = vld [vmem:[%s7 + $0x8] sm:$0xf]
    %v541 = vld [vmem:[%s7 + $0xc] sm:$0xf]
    %v542 = vld [vmem:[%s8] sm:$0x1]
    %v544 = vlaneseq
    %v545 = vshrl.u32 %v544, 7
    %v546 = vsub.s32 0, %v545
    %v547 = vrot.slane %v542, %v546
    %v553 = vunpack.c.l.b16 %v538
    %v554 = vunpack.c.l.b16 %v539
    %v555 = vunpack.c.l.b16 %v540
    %v556 = vunpack.c.l.b16 %v541
    %v557 = vpack.c.b16 %v554, %v553
    %v558 = vpack.c.b16 %v556, %v555
    %v562 = vsel %vm252, %v531, 0
    %v565 = vsel %vm252, %v532, 0
    %v568 = vsel %vm252, %v533, 0
    %v571 = vsel %vm252, %v534, 0
    %v574 = vsel %vm252, %v535, 0
    %v577 = vsel %vm252, %v536, 0
    %v580 = vsel %vm252, %v537, 0
    %582 = vmatprep.subr.bf16.mxu0 0
    %583 = vmatpush1.bf16.msra.mxu0 %v557
    %584 = vmatprep.subr.bf16.mxu0 0
    %585 = vmatpush1.bf16.msra.mxu0 %v558
    %586 = vmatprep.subr.bf16.mxu0 0
    %587 = vmatpush1.bf16.msra.mxu0 0
    %588 = vmatprep.subr.bf16.mxu0 0
    %589 = vmatpush1.bf16.msra.mxu0 0
    %590 = vmatprep.subr.bf16.mxu0 0
    %591 = vmatpush1.bf16.msra.mxu0 0
    %592 = vmatprep.subr.bf16.mxu0 0
    %593 = vmatpush1.bf16.msra.mxu0 0
    %594 = vmatprep.subr.bf16.mxu0 0
    %595 = vmatpush1.bf16.msra.mxu0 0
    %596 = vmatprep.subr.bf16.mxu0 0
    %597 = vmatpush1.bf16.msra.mxu0 0
    %598 = vmatprep.subr.bf16.mxu0 0
    %599 = vmatpush1.bf16.msra.mxu0 0
    %600 = vmatprep.subr.bf16.mxu0 0
    %601 = vmatpush1.bf16.msra.mxu0 0
    %602 = vmatprep.subr.bf16.mxu0 0
    %603 = vmatpush1.bf16.msra.mxu0 0
    %604 = vmatprep.subr.bf16.mxu0 0
    %605 = vmatpush1.bf16.msra.mxu0 0
    %606 = vmatprep.subr.bf16.mxu0 0
    %607 = vmatpush1.bf16.msra.mxu0 0
    %608 = vmatprep.subr.bf16.mxu0 0
    %609 = vmatpush1.bf16.msra.mxu0 0
    %610 = vmatprep.subr.bf16.mxu0 0
    %611 = vmatpush1.bf16.msra.mxu0 0
    %612 = vmatprep.subr.bf16.mxu0 0
    %613 = vmatpush1.bf16.msra.mxu0 0
    %614 = vmatprep.mubr.bf16.mxu0 0
    %615 = vmatmul.mubr.bf16.gmra.mrb[0].mxu0 %v562
    %v616 = vpop.f32.mrb[0].mxu0
    %v617 = vadd.f32 %v547, %v616
    %v618 = vpop.f32.mrb[0].mxu0
    %v619 = vpop.f32.mrb[0].mxu0
    %v620 = vadd.f32 %v547, %v619
    %v621 = vpop.f32.mrb[0].mxu0
    %622 = vmatprep.mubr.bf16.mxu0 0
    %623 = vmatmul.mubr.bf16.gmra.mrb[0].mxu0 %v565
    %v624 = vpop.f32.mrb[0].mxu0
    %v625 = vadd.f32 %v547, %v624
    %v626 = vpop.f32.mrb[0].mxu0
    %v627 = vpop.f32.mrb[0].mxu0
    %v628 = vadd.f32 %v547, %v627
    %v629 = vpop.f32.mrb[0].mxu0
    %630 = vmatprep.mubr.bf16.mxu0 0
    %631 = vmatmul.mubr.bf16.gmra.mrb[0].mxu0 %v568
    %v632 = vpop.f32.mrb[0].mxu0
    %v633 = vadd.f32 %v547, %v632
    %v634 = vpop.f32.mrb[0].mxu0
    %v635 = vpop.f32.mrb[0].mxu0
    %v636 = vadd.f32 %v547, %v635
    %v637 = vpop.f32.mrb[0].mxu0
    %638 = vmatprep.mubr.bf16.mxu0 0
    %639 = vmatmul.mubr.bf16.gmra.mrb[0].mxu0 %v571
    %v640 = vpop.f32.mrb[0].mxu0
    %v641 = vadd.f32 %v547, %v640
    %v642 = vpop.f32.mrb[0].mxu0
    %v643 = vpop.f32.mrb[0].mxu0
    %v644 = vadd.f32 %v547, %v643
    %v645 = vpop.f32.mrb[0].mxu0
    %646 = vmatprep.mubr.bf16.mxu0 0
    %647 = vmatmul.mubr.bf16.gmra.mrb[0].mxu0 %v574
    %v648 = vpop.f32.mrb[0].mxu0
    %v649 = vadd.f32 %v547, %v648
    %v650 = vpop.f32.mrb[0].mxu0
    %v651 = vpop.f32.mrb[0].mxu0
    %v652 = vadd.f32 %v547, %v651
    %v653 = vpop.f32.mrb[0].mxu0
    %654 = vmatprep.mubr.bf16.mxu0 0
    %655 = vmatmul.mubr.bf16.gmra.mrb[0].mxu0 %v577
    %v656 = vpop.f32.mrb[0].mxu0
    %v657 = vadd.f32 %v547, %v656
    %v658 = vpop.f32.mrb[0].mxu0
    %v659 = vpop.f32.mrb[0].mxu0
    %v660 = vadd.f32 %v547, %v659
    %v661 = vpop.f32.mrb[0].mxu0
    %662 = vmatprep.mubr.bf16.mxu0 0
    %663 = vmatmul.mubr.bf16.gmra.mrb[0].mxu0 %v580
    %v664 = vpop.f32.mrb[0].mxu0
    %v665 = vadd.f32 %v547, %v664
    %v666 = vpop.f32.mrb[0].mxu0
    %v667 = vpop.f32.mrb[0].mxu0
    %v668 = vadd.f32 %v547, %v667
    %v669 = vpop.f32.mrb[0].mxu0
    %670 = vdwg.mxu0
    %vm671 = vcmask 64512
    %672 = vst.msk [vmem:[#allocation2] sm:$0xff] %vm671, %v617
    %673 = vst.msk [vmem:[#allocation2 + $0x8] sm:$0xff] %vm671, %v620
    %674 = vst.msk [vmem:[#allocation2 + $0x10] sm:$0xff] %vm671, %v625
    %675 = vst.msk [vmem:[#allocation2 + $0x18] sm:$0xff] %vm671, %v628
    %676 = vst.msk [vmem:[#allocation2 + $0x20] sm:$0xff] %vm671, %v633
    %677 = vst.msk [vmem:[#allocation2 + $0x28] sm:$0xff] %vm671, %v636
    %678 = vst.msk [vmem:[#allocation2 + $0x30] sm:$0xff] %vm671, %v641
    %679 = vst.msk [vmem:[#allocation2 + $0x38] sm:$0xff] %vm671, %v644
    %680 = vst.msk [vmem:[#allocation2 + $0x40] sm:$0xff] %vm671, %v649
    %681 = vst.msk [vmem:[#allocation2 + $0x48] sm:$0xff] %vm671, %v652
    %682 = vst.msk [vmem:[#allocation2 + $0x50] sm:$0xff] %vm671, %v657
    %683 = vst.msk [vmem:[#allocation2 + $0x58] sm:$0xff] %vm671, %v660
    %684 = vst.msk [vmem:[#allocation2 + $0x60] sm:$0xff] %vm671, %v665
    %685 = vst.msk [vmem:[#allocation2 + $0x68] sm:$0xff] %vm671, %v668
    // Predicated region
    $region38: #{tpu_custom_call.1} parent=1 // pred_check
      _
    $region39: #{tpu_custom_call.1} parent=1 // pred_check_branch
      %687 = sbr.rel (0) target = $region41
    $region40: #{tpu_custom_call.1} parent=1 // pred_region
      // Predicated region
      $region42: #{tpu_custom_call.1} parent=40 // pred_check
        _
      $region43: #{tpu_custom_call.1} parent=40 // pred_check_branch
        %689 = sbr.rel (0) target = $region45
      $region44: #{tpu_custom_call.1} parent=40 // pred_region
        // Predicated region
        $region46: #{tpu_custom_call.1} parent=44 // pred_check
          _
        $region47: #{tpu_custom_call.1} parent=44 // pred_check_branch
          %691 = sbr.rel (0) target = $region49
        $region48: #{tpu_custom_call.1} parent=44 // pred_region
          // Predicated region
          $region61: #{tpu_custom_call.1} parent=48 // pred_check
            _
          $region62: #{tpu_custom_call.1} parent=48 // pred_check_branch
            %730 = sbr.rel (0) target = $region64
          $region63: #{tpu_custom_call.1} parent=48 // pred_region
            loop: start=0, step=1, limit=1
            $region65: #{tpu_custom_call.1} parent=63 // loop_pre_header
              _
            $region66: #{tpu_custom_call.1} parent=63 // loop_header
              %s732 = sphi 0, %s736
              %p733 = scmp.ge.s32.totalorder %s732, 1
              %s737 = sphi [#allocation2], [#allocation2]
              %s738 = sphi %s9, %s9
            $region67: #{tpu_custom_call.1} parent=63 // loop_header_branch
              %735 = sbr.rel (%p733) target = $region71
            $region68: #{tpu_custom_call.1} parent=63 // loop_body
              %v739 = vld [vmem:[%s737] sm:$0xff]
              %740 = vst [vmem:[%s738] sm:$0xff] %v739
              %v741 = vld [vmem:[%s737 + $0x8] sm:$0xff]
              %742 = vst [vmem:[%s738 + $0x8] sm:$0xff] %v741
              %v743 = vld [vmem:[%s737 + $0x10] sm:$0xff]
              %744 = vst [vmem:[%s738 + $0x10] sm:$0xff] %v743
              %v745 = vld [vmem:[%s737 + $0x18] sm:$0xff]
              %746 = vst [vmem:[%s738 + $0x18] sm:$0xff] %v745
              %v747 = vld [vmem:[%s737 + $0x20] sm:$0xff]
              %748 = vst [vmem:[%s738 + $0x20] sm:$0xff] %v747
              %v749 = vld [vmem:[%s737 + $0x28] sm:$0xff]
              %750 = vst [vmem:[%s738 + $0x28] sm:$0xff] %v749
              %v751 = vld [vmem:[%s737 + $0x30] sm:$0xff]
              %752 = vst [vmem:[%s738 + $0x30] sm:$0xff] %v751
              %v753 = vld [vmem:[%s737 + $0x38] sm:$0xff]
              %754 = vst [vmem:[%s738 + $0x38] sm:$0xff] %v753
              %v755 = vld [vmem:[%s737 + $0x40] sm:$0xff]
              %756 = vst [vmem:[%s738 + $0x40] sm:$0xff] %v755
              %v757 = vld [vmem:[%s737 + $0x48] sm:$0xff]
              %758 = vst [vmem:[%s738 + $0x48] sm:$0xff] %v757
              %v759 = vld [vmem:[%s737 + $0x50] sm:$0xff]
              %760 = vst [vmem:[%s738 + $0x50] sm:$0xff] %v759
              %v761 = vld [vmem:[%s737 + $0x58] sm:$0xff]
              %762 = vst [vmem:[%s738 + $0x58] sm:$0xff] %v761
              %v763 = vld [vmem:[%s737 + $0x60] sm:$0xff]
              %764 = vst [vmem:[%s738 + $0x60] sm:$0xff] %v763
            $region69: #{tpu_custom_call.1} parent=63 // loop_footer
              %s736 = sadd.s32 1, %s732
            $region70: #{tpu_custom_call.1} parent=63 // loop_footer_branch
              %731 = sbr.rel target = $region66
            $region71: #{tpu_custom_call.1} parent=63 // loop_exit
              _
          $region64: #{tpu_custom_call.1} parent=48 // pred_fallthru
            _
          // Predicated region
          $region72: #{tpu_custom_call.1} parent=48 // pred_check
            _
          $region73: #{tpu_custom_call.1} parent=48 // pred_check_branch
            %766 = sbr.rel target = $region75
          $region74: #{tpu_custom_call.1} parent=48 // pred_region
            _
          $region75: #{tpu_custom_call.1} parent=48 // pred_fallthru
            _
        $region49: #{tpu_custom_call.1} parent=44 // pred_fallthru
          _
        // Predicated region
        $region50: #{tpu_custom_call.1} parent=44 // pred_check
          _
        $region51: #{tpu_custom_call.1} parent=44 // pred_check_branch
          %693 = sbr.rel target = $region53
        $region52: #{tpu_custom_call.1} parent=44 // pred_region
          loop: start=0, step=1, limit=1
          $region54: #{tpu_custom_call.1} parent=52 // loop_pre_header
            _
          $region55: #{tpu_custom_call.1} parent=52 // loop_header
            %s696 = sphi 0, %s700
            %p697 = scmp.ge.s32.totalorder %s696, 1
            %s701 = sphi [#allocation2], [#allocation2]
            %s702 = sphi %s9, %s9
          $region56: #{tpu_custom_call.1} parent=52 // loop_header_branch
            %699 = sbr.rel (%p697) target = $region60
          $region57: #{tpu_custom_call.1} parent=52 // loop_body
            %v703 = vld [vmem:[%s701] sm:$0xff]
            %704 = vst [vmem:[%s702] sm:$0xff] %v703
            %v705 = vld [vmem:[%s701 + $0x8] sm:$0xff]
            %706 = vst [vmem:[%s702 + $0x8] sm:$0xff] %v705
            %v707 = vld [vmem:[%s701 + $0x10] sm:$0xff]
            %708 = vst [vmem:[%s702 + $0x10] sm:$0xff] %v707
            %v709 = vld [vmem:[%s701 + $0x18] sm:$0xff]
            %710 = vst [vmem:[%s702 + $0x18] sm:$0xff] %v709
            %v711 = vld [vmem:[%s701 + $0x20] sm:$0xff]
            %712 = vst [vmem:[%s702 + $0x20] sm:$0xff] %v711
            %v713 = vld [vmem:[%s701 + $0x28] sm:$0xff]
            %714 = vst [vmem:[%s702 + $0x28] sm:$0xff] %v713
            %v715 = vld [vmem:[%s701 + $0x30] sm:$0xff]
            %716 = vst [vmem:[%s702 + $0x30] sm:$0xff] %v715
            %v717 = vld [vmem:[%s701 + $0x38] sm:$0xff]
            %718 = vst [vmem:[%s702 + $0x38] sm:$0xff] %v717
            %v719 = vld [vmem:[%s701 + $0x40] sm:$0xff]
            %720 = vst [vmem:[%s702 + $0x40] sm:$0xff] %v719
            %v721 = vld [vmem:[%s701 + $0x48] sm:$0xff]
            %722 = vst [vmem:[%s702 + $0x48] sm:$0xff] %v721
            %v723 = vld [vmem:[%s701 + $0x50] sm:$0xff]
            %724 = vst [vmem:[%s702 + $0x50] sm:$0xff] %v723
            %v725 = vld [vmem:[%s701 + $0x58] sm:$0xff]
            %726 = vst [vmem:[%s702 + $0x58] sm:$0xff] %v725
            %v727 = vld [vmem:[%s701 + $0x60] sm:$0xff]
            %728 = vst [vmem:[%s702 + $0x60] sm:$0xff] %v727
          $region58: #{tpu_custom_call.1} parent=52 // loop_footer
            %s700 = sadd.s32 1, %s696
          $region59: #{tpu_custom_call.1} parent=52 // loop_footer_branch
            %695 = sbr.rel target = $region55
          $region60: #{tpu_custom_call.1} parent=52 // loop_exit
            _
        $region53: #{tpu_custom_call.1} parent=44 // pred_fallthru
          _
      $region45: #{tpu_custom_call.1} parent=40 // pred_fallthru
        _
      %767 = vnop
    $region41: #{tpu_custom_call.1} parent=1 // pred_fallthru
      _
    // Predicated region
    $region76: #{tpu_custom_call.1} parent=1 // pred_check
      _
    $region77: #{tpu_custom_call.1} parent=1 // pred_check_branch
      %769 = sbr.rel (0) target = $region79
    $region78: #{tpu_custom_call.1} parent=1 // pred_region
      _
    $region79: #{tpu_custom_call.1} parent=1 // pred_fallthru
      _

</llo_original>
